<compile_context>
chip_gen: v7x
topology: tpu7x:2x2x1
jax: 0.10.0
libtpu: 0.0.40
codegen_flags: <defaults>
</compile_context>

<pallas_src>
import jax
import jax.numpy as jnp
import numpy as np
from jax import lax
from jax.experimental import pallas as pl
from jax.experimental.pallas import tpu as pltpu


# ---------------------------------------------------------------------------
# LayerNorm helpers
# ---------------------------------------------------------------------------

def _ln_normalize_fm(h, eps=1e-5):
    """Normalize over the feature (sublane) axis of a feature-major (H, bt) tile."""
    mu = jnp.mean(h, axis=0, keepdims=True)                # (1, bt)
    var = jnp.mean((h - mu) ** 2, axis=0, keepdims=True)   # (1, bt), biased (matches PyTorch)
    return (h - mu) * lax.rsqrt(var + eps)


def _layer_norm_fm(h, gamma, beta, eps=1e-5):
    return _ln_normalize_fm(h, eps) * gamma + beta         # gamma/beta are (H, 1)


def _layer_norm_ref(x, gamma, beta, eps=1e-5):
    """Batch-major LayerNorm for the pure-JAX reference."""
    mu = jnp.mean(x, axis=-1, keepdims=True)
    var = jnp.mean((x - mu) ** 2, axis=-1, keepdims=True)
    return (x - mu) * lax.rsqrt(var + eps) * gamma + beta


# ---------------------------------------------------------------------------
# Kernel
# ---------------------------------------------------------------------------
# Packed f32 vector buffer layout (columns of a (4H, 7L+3) array):
#   col 0                : input_proj bias bp                       (H rows)
#   cols 1+7l .. 1+7l+6  : per layer l -> bvo, g1, be1, b1(4H), b2, g2, be2
#   col 1+7L             : g2_last * wout   (folded output projection, H rows)
#   col 1+7L+1           : row 0 = sum(be2_last*wout) + bout, rest zero
# (g2/be2 of the last layer are packed for layout uniformity but never read.)

def _transformer_kernel(x_ref, wp_ref, wvo_ref, w1_ref, w2_ref, vb_ref, out_ref):
    cdt = wp_ref.dtype                 # matmul operand dtype (bf16/f32); accum is f32
    H = wp_ref.shape[0]
    F = w1_ref.shape[1]                # dim_feedforward = 4H
    L = wvo_ref.shape[0]

    def vec(col, rows=H):
        # (rows, 1) f32 column, feature-major; static ref slice (no runtime cost).
        return vb_ref[0:rows, col:col + 1]

    # input_proj: (H, D) @ (D, bt) -> (H, bt), f32 accumulate
    h = jnp.dot(wp_ref[...], x_ref[...], preferred_element_type=jnp.float32) + vec(0)

    for l in range(L):                 # static unroll over the encoder layers
        base = 1 + 7 * l
        # ---- self-attention (seq_len == 1 => softmax == 1): fused V/out proj ----
        attn = (jnp.dot(wvo_ref[l], h.astype(cdt),
                        preferred_element_type=jnp.float32) + vec(base + 0))
        h = _layer_norm_fm(h + attn, vec(base + 1), vec(base + 2))

        # ---- feed-forward (ReLU is the PyTorch default activation) ----
        ff = (jnp.dot(w1_ref[l], h.astype(cdt),
                      preferred_element_type=jnp.float32) + vec(base + 3, rows=F))
        ff = jnp.maximum(ff, 0.0)
        ff = (jnp.dot(w2_ref[l], ff.astype(cdt),
                      preferred_element_type=jnp.float32) + vec(base + 4))
        h = h + ff
        if l + 1 < L:
            h = _layer_norm_fm(h, vec(base + 5), vec(base + 6))
        else:
            # Last LayerNorm's affine is folded into the output projection.
            h = _ln_normalize_fm(h)

    # mean over seq (length 1) is identity.  output_proj H->1 on the VPU/XLU
    # (elementwise mul + sublane reduce); result is a lane-dense (1, bt) row.
    wcol = 1 + 7 * L
    logits = (jnp.sum(h * vec(wcol), axis=0, keepdims=True)
              + vb_ref[0:1, wcol + 1:wcol + 2])
    out_ref[...] = jax.nn.sigmoid(logits)


# ---------------------------------------------------------------------------
# Wrapper
# ---------------------------------------------------------------------------

def _num_tensorcores_per_chip():
    # v7x has 2 TensorCores per chip (grid "parallel" axis shards across them);
    # v5e / v6e have 1, so the grid is a purely serial loop there.
    try:
        kind = jax.devices()[0].device_kind.lower()
    except Exception:
        return 1
    return 2 if "v7" in kind else 1


def _pick_batch_tile(B, num_tc=1, max_bt=4096):
    """Fewest grid steps possible: 1 on single-TC chips, one tile per core on v7x."""
    if num_tc > 1 and B > 128:
        bt = B // num_tc
        if B % num_tc == 0 and bt % 128 == 0 and bt <= max_bt:
            return bt
    if B <= max_bt:
        return B                       # single grid step
    # Large batch: largest lane-aligned divisor of B that fits.
    start = min(max_bt, B) - (min(max_bt, B) % 128)
    for bt in range(start, 127, -128):
        if B % bt == 0:
            return bt
    return B


def _prepare_kernel_params(p, compute_dtype):
    """Feature-major transpose, Q/K pruning, Wv/Wo fusion, operand packing."""
    H = p["wp"].shape[1]
    L = p["wqkv"].shape[0]
    F = p["w1"].shape[2]
    f32 = jnp.float32

    def col(v):
        v = jnp.asarray(v).reshape(-1).astype(f32)
        return jnp.pad(v, (0, F - v.shape[0]))             # pad to F rows

    wp = p["wp"].T.astype(compute_dtype)                    # (H, D) feature-major

    wvo_l, w1_l, w2_l = [], [], []
    cols = [col(p["bp"])]
    for l in range(L):
        wv = p["wqkv"][l][:, 2 * H:]                        # V columns only (Q/K unused)
        bv = p["bqkv"][l][:, 2 * H:].reshape(H)
        wo = p["wo"][l]
        bo = p["bo"][l].reshape(H)
        # Fused feature-major V -> out projection (exact: linear o linear).
        wvo_fm = (wv @ wo).T                                # == wo.T @ wv.T, (H, H)
        bvo = wo.T @ bv + bo                                # (H,)
        wvo_l.append(wvo_fm.astype(compute_dtype))
        w1_l.append(p["w1"][l].T.astype(compute_dtype))     # (F, H)
        w2_l.append(p["w2"][l].T.astype(compute_dtype))     # (H, F)
        cols += [col(bvo), col(p["g1"][l]), col(p["be1"][l]), col(p["b1"][l]),
                 col(p["b2"][l]), col(p["g2"][l]), col(p["be2"][l])]

    # Fold the final LayerNorm affine into the output projection (exact algebra).
    wout = p["wout"].reshape(H).astype(f32)
    g2_last = p["g2"][L - 1].reshape(H).astype(f32)
    be2_last = p["be2"][L - 1].reshape(H).astype(f32)
    c = jnp.sum(be2_last * wout) + p["bout"].reshape(()).astype(f32)
    cols += [col(g2_last * wout), jnp.zeros((F,), f32).at[0].set(c)]

    return {
        "wp": wp,                                           # (H, D)
        "wvo": jnp.stack(wvo_l, axis=0),                    # (L, H, H)
        "w1": jnp.stack(w1_l, axis=0),                      # (L, F, H)
        "w2": jnp.stack(w2_l, axis=0),                      # (L, H, F)
        "vecbuf": jnp.stack(cols, axis=1).astype(f32),      # (F, 7L+3)
    }


def small_transformer(x, params, *, batch_tile=None, compute_dtype=jnp.bfloat16):
    B, D = x.shape
    H = params["wp"].shape[1]
    L = params["wqkv"].shape[0]

    bt = (_pick_batch_tile(B, _num_tensorcores_per_chip())
          if batch_tile is None else batch_tile)
    assert B % bt == 0, "batch must be divisible by batch_tile"
    assert bt % 128 == 0 or bt == B, \
        "batch_tile must be a multiple of 128 (lane width) or the full batch"
    num_tiles = B // bt

    kp = _prepare_kernel_params(params, compute_dtype)
    ordered = [kp[k] for k in ("wp", "wvo", "w1", "w2", "vecbuf")]

    # Batch on the lane (last) axis, features on sublanes.
    x_t = x.T.astype(compute_dtype)                         # (D, B)

    def const_spec(a):
        nd = a.ndim
        return pl.BlockSpec(a.shape, lambda i, _n=nd: (0,) * _n)

    in_specs = [pl.BlockSpec((D, bt), lambda i: (0, i))]
    in_specs += [const_spec(a) for a in ordered]
    out_specs = pl.BlockSpec((1, bt), lambda i: (0, i))     # lane-dense output row

    weight_bytes = sum(int(a.size) * a.dtype.itemsize for a in ordered)
    # Weights (double-buffered) + ~4 KB/element of f32 intermediates + headroom;
    # well under physical VMEM on v5e/v6e (128 MiB) and v7x (64 MiB).
    vmem_limit = int(min(max(2 * weight_bytes + bt * 4096 + (4 << 20), 32 << 20),
                         56 << 20))

    flops = 2 * B * (D * H + L * 9 * H * H + H)
    transcendentals = B * (2 * L + 1)                       # rsqrt per LN + sigmoid
    bytes_accessed = int(x_t.size * x_t.dtype.itemsize + weight_bytes + B * 4)

    out = pl.pallas_call(
        _transformer_kernel,
        out_shape=jax.ShapeDtypeStruct((1, B), jnp.float32),
        grid=(num_tiles,),
        in_specs=in_specs,
        out_specs=out_specs,
        compiler_params=pltpu.CompilerParams(
            dimension_semantics=("parallel",),
            vmem_limit_bytes=vmem_limit),
        cost_estimate=pl.CostEstimate(
            flops=flops,
            transcendentals=transcendentals,
            bytes_accessed=bytes_accessed),
    )(x_t, *ordered)
    return out.reshape(B)                                   # lane j of tile i = batch i*bt + j


# ---------------------------------------------------------------------------
# Parameter init + pure-JAX reference (mirrors the PyTorch module in eval mode)
# ---------------------------------------------------------------------------

def init_params(key, input_dim, hidden_dim=64, n_heads=4, n_layers=2):
    # n_heads does not affect the math: with seq_len == 1 the per-head softmax
    # is 1 regardless of the head count.
    ff = hidden_dim * 4
    k_in, k_out, k_layers = jax.random.split(key, 3)

    def rnd(k, shape, scale=0.05):
        return (scale * jax.random.normal(k, shape)).astype(jnp.float32)

    p = {}
    kw, kb = jax.random.split(k_in)
    p["wp"] = rnd(kw, (input_dim, hidden_dim))
    p["bp"] = rnd(kb, (1, hidden_dim))

    buckets = {name: [] for name in ("wqkv", "bqkv", "wo", "bo", "g1", "be1",
                                     "w1", "b1", "w2", "b2", "g2", "be2")}
    for lk in jax.random.split(k_layers, n_layers):
        sub = jax.random.split(lk, 8)
        buckets["wqkv"].append(rnd(sub[0], (hidden_dim, 3 * hidden_dim)))
        buckets["bqkv"].append(rnd(sub[1], (1, 3 * hidden_dim)))
        buckets["wo"].append(rnd(sub[2], (hidden_dim, hidden_dim)))
        buckets["bo"].append(rnd(sub[3], (1, hidden_dim)))
        buckets["g1"].append(jnp.ones((1, hidden_dim), jnp.float32))
        buckets["be1"].append(jnp.zeros((1, hidden_dim), jnp.float32))
        buckets["w1"].append(rnd(sub[4], (hidden_dim, ff)))
        buckets["b1"].append(rnd(sub[5], (1, ff)))
        buckets["w2"].append(rnd(sub[6], (ff, hidden_dim)))
        buckets["b2"].append(rnd(sub[7], (1, hidden_dim)))
        buckets["g2"].append(jnp.ones((1, hidden_dim), jnp.float32))
        buckets["be2"].append(jnp.zeros((1, hidden_dim), jnp.float32))
    for name, vals in buckets.items():
        p[name] = jnp.stack(vals, axis=0)

    kw, kb = jax.random.split(k_out)
    p["wout"] = rnd(kw, (hidden_dim, 1))
    p["bout"] = rnd(kb, (1, 1))
    return p


def reference_forward(x, p):
    # Pure-JAX, full-f32 mirror of the PyTorch forward (eval mode, seq_len == 1).
    H = p["wp"].shape[1]
    h = x @ p["wp"] + p["bp"]
    for l in range(p["wqkv"].shape[0]):
        v = h @ p["wqkv"][l][:, 2 * H:] + p["bqkv"][l][:, 2 * H:]
        attn = v @ p["wo"][l] + p["bo"][l]
        h = _layer_norm_ref(h + attn, p["g1"][l], p["be1"][l])
        ffh = jnp.maximum(h @ p["w1"][l] + p["b1"][l], 0.0)
        ffh = ffh @ p["w2"][l] + p["b2"][l]
        h = _layer_norm_ref(h + ffh, p["g2"][l], p["be2"][l])
    logits = h @ p["wout"] + p["bout"]
    return jax.nn.sigmoid(logits)[:, 0]


if __name__ == "__main__":
    key = jax.random.PRNGKey(0)
    kx, kp = jax.random.split(key)

    B, D, H = 256, 16, 64   # batch, input_dim, hidden_dim
    x = jax.random.normal(kx, (B, D), dtype=jnp.float32)
    params = init_params(kp, D, hidden_dim=H, n_heads=4, n_layers=2)

    ref = reference_forward(x, params)

    # f32 MXU operands: tight check against the pure-JAX reference.
    out_f32 = jax.block_until_ready(
        small_transformer(x, params, compute_dtype=jnp.float32))
    assert out_f32.shape == (B,)
    if not np.allclose(np.asarray(out_f32), np.asarray(ref), atol=2e-3, rtol=2e-3):
        raise AssertionError("f32 Pallas kernel does not match pure-JAX reference")

    # bf16 MXU operands (f32 accumulate, f32 LayerNorm): loose sanity check.
    out_bf16 = jax.block_until_ready(
        small_transformer(x, params, compute_dtype=jnp.bfloat16))
    assert out_bf16.shape == (B,)
    if not np.allclose(np.asarray(out_bf16), np.asarray(ref), atol=2e-2, rtol=2e-2):
        raise AssertionError("bf16 Pallas kernel deviates too far from reference")

    print("KERNEL_OK")
</pallas_src>

<mosaic_0001>
module attributes {stable_mosaic.version = 11 : i64} {
  func.func @_transformer_kernel(%arg0: i32, %arg1: memref<16x256xf32, #tpu.memory_space<vmem>>, %arg2: memref<64x16xf32, #tpu.memory_space<vmem>>, %arg3: memref<2x64x64xf32, #tpu.memory_space<vmem>>, %arg4: memref<2x256x64xf32, #tpu.memory_space<vmem>>, %arg5: memref<2x64x256xf32, #tpu.memory_space<vmem>>, %arg6: memref<256x17xf32, #tpu.memory_space<vmem>>, %arg7: memref<1x256xf32, #tpu.memory_space<vmem>>) attributes {dimension_semantics = [#tpu.dimension_semantics<parallel>], iteration_bounds = array<i64: 1>, scalar_prefetch = 0 : i64, scratch_operands = 0 : i64, tpu.core_type = #tpu.core_type<tc>, window_params = [{transform_indices = @transform_0, window_bounds = array<i64: 16, 256>}, {pipeline_mode = #tpu.pipeline_mode<synchronous>, transform_indices = @transform_1, window_bounds = array<i64: 64, 16>}, {pipeline_mode = #tpu.pipeline_mode<synchronous>, transform_indices = @transform_2, window_bounds = array<i64: 2, 64, 64>}, {pipeline_mode = #tpu.pipeline_mode<synchronous>, transform_indices = @transform_3, window_bounds = array<i64: 2, 256, 64>}, {pipeline_mode = #tpu.pipeline_mode<synchronous>, transform_indices = @transform_4, window_bounds = array<i64: 2, 64, 256>}, {pipeline_mode = #tpu.pipeline_mode<synchronous>, transform_indices = @transform_5, window_bounds = array<i64: 256, 17>}, {transform_indices = @transform_6, window_bounds = array<i64: 1, 256>}]} {
    %c0 = arith.constant 0 : index
    %c0_0 = arith.constant 0 : index
    %0 = vector.load %arg2[%c0, %c0_0] : memref<64x16xf32, #tpu.memory_space<vmem>>, vector<64x16xf32>
    %c0_1 = arith.constant 0 : index
    %c0_2 = arith.constant 0 : index
    %1 = vector.load %arg1[%c0_1, %c0_2] : memref<16x256xf32, #tpu.memory_space<vmem>>, vector<16x256xf32>
    %cst = arith.constant dense<0.000000e+00> : vector<64x256xf32>
    %2 = tpu.matmul %0, %1, %cst {dimension_numbers = #tpu.dot_dimension_numbers<[1], [0], [0], [1], [0, 0, 1, 1], [], []>} : vector<64x16xf32>, vector<16x256xf32>, vector<64x256xf32> -> vector<64x256xf32>
    %c0_3 = arith.constant 0 : index
    %c0_4 = arith.constant 0 : index
    %3 = vector.load %arg6[%c0_3, %c0_4] : memref<256x17xf32, #tpu.memory_space<vmem>>, vector<64x1xf32>
    %4 = vector.broadcast %3 : vector<64x1xf32> to vector<64x256xf32>
    %5 = arith.addf %2, %4 : vector<64x256xf32>
    %c0_5 = arith.constant 0 : index
    %c0_6 = arith.constant 0 : index
    %c0_7 = arith.constant 0 : index
    %6 = vector.load %arg3[%c0_5, %c0_6, %c0_7] : memref<2x64x64xf32, #tpu.memory_space<vmem>>, vector<1x64x64xf32>
    %7 = vector.shape_cast %6 : vector<1x64x64xf32> to vector<64x64xf32>
    %cst_8 = arith.constant dense<0.000000e+00> : vector<64x256xf32>
    %8 = tpu.matmul %7, %5, %cst_8 {dimension_numbers = #tpu.dot_dimension_numbers<[1], [0], [0], [1], [0, 0, 1, 1], [], []>} : vector<64x64xf32>, vector<64x256xf32>, vector<64x256xf32> -> vector<64x256xf32>
    %c0_9 = arith.constant 0 : index
    %c1 = arith.constant 1 : index
    %9 = vector.load %arg6[%c0_9, %c1] : memref<256x17xf32, #tpu.memory_space<vmem>>, vector<64x1xf32>
    %10 = vector.broadcast %9 : vector<64x1xf32> to vector<64x256xf32>
    %11 = arith.addf %8, %10 : vector<64x256xf32>
    %12 = arith.addf %5, %11 : vector<64x256xf32>
    %c0_10 = arith.constant 0 : index
    %c2 = arith.constant 2 : index
    %13 = vector.load %arg6[%c0_10, %c2] : memref<256x17xf32, #tpu.memory_space<vmem>>, vector<64x1xf32>
    %c0_11 = arith.constant 0 : index
    %c3 = arith.constant 3 : index
    %14 = vector.load %arg6[%c0_11, %c3] : memref<256x17xf32, #tpu.memory_space<vmem>>, vector<64x1xf32>
    %cst_12 = arith.constant dense<0.000000e+00> : vector<256xf32>
    %15 = vector.multi_reduction <add>, %12, %cst_12 [0] : vector<64x256xf32> to vector<256xf32>
    %16 = vector.shape_cast %15 : vector<256xf32> to vector<1x256xf32>
    %cst_13 = arith.constant 6.400000e+01 : f32
    %17 = vector.broadcast %cst_13 : f32 to vector<1x256xf32>
    %18 = arith.divf %16, %17 : vector<1x256xf32>
    %19 = vector.broadcast %18 : vector<1x256xf32> to vector<64x256xf32>
    %20 = arith.subf %12, %19 : vector<64x256xf32>
    %21 = arith.mulf %20, %20 : vector<64x256xf32>
    %cst_14 = arith.constant dense<0.000000e+00> : vector<256xf32>
    %22 = vector.multi_reduction <add>, %21, %cst_14 [0] : vector<64x256xf32> to vector<256xf32>
    %23 = vector.shape_cast %22 : vector<256xf32> to vector<1x256xf32>
    %cst_15 = arith.constant 6.400000e+01 : f32
    %24 = vector.broadcast %cst_15 : f32 to vector<1x256xf32>
    %25 = arith.divf %23, %24 : vector<1x256xf32>
    %26 = vector.broadcast %18 : vector<1x256xf32> to vector<64x256xf32>
    %27 = arith.subf %12, %26 : vector<64x256xf32>
    %cst_16 = arith.constant 9.99999974E-6 : f32
    %28 = vector.broadcast %cst_16 : f32 to vector<1x256xf32>
    %29 = arith.addf %25, %28 : vector<1x256xf32>
    %30 = math.rsqrt %29 : vector<1x256xf32>
    %31 = vector.broadcast %30 : vector<1x256xf32> to vector<64x256xf32>
    %32 = arith.mulf %27, %31 : vector<64x256xf32>
    %33 = vector.broadcast %13 : vector<64x1xf32> to vector<64x256xf32>
    %34 = arith.mulf %32, %33 : vector<64x256xf32>
    %35 = vector.broadcast %14 : vector<64x1xf32> to vector<64x256xf32>
    %36 = arith.addf %34, %35 : vector<64x256xf32>
    %c0_17 = arith.constant 0 : index
    %c0_18 = arith.constant 0 : index
    %c0_19 = arith.constant 0 : index
    %37 = vector.load %arg4[%c0_17, %c0_18, %c0_19] : memref<2x256x64xf32, #tpu.memory_space<vmem>>, vector<1x256x64xf32>
    %38 = vector.shape_cast %37 : vector<1x256x64xf32> to vector<256x64xf32>
    %cst_20 = arith.constant dense<0.000000e+00> : vector<256x256xf32>
    %39 = tpu.matmul %38, %36, %cst_20 {dimension_numbers = #tpu.dot_dimension_numbers<[1], [0], [0], [1], [0, 0, 1, 1], [], []>} : vector<256x64xf32>, vector<64x256xf32>, vector<256x256xf32> -> vector<256x256xf32>
    %c0_21 = arith.constant 0 : index
    %c4 = arith.constant 4 : index
    %40 = vector.load %arg6[%c0_21, %c4] : memref<256x17xf32, #tpu.memory_space<vmem>>, vector<256x1xf32>
    %41 = vector.broadcast %40 : vector<256x1xf32> to vector<256x256xf32>
    %42 = arith.addf %39, %41 : vector<256x256xf32>
    %cst_22 = arith.constant 0.000000e+00 : f32
    %43 = vector.broadcast %cst_22 : f32 to vector<256x256xf32>
    %44 = arith.maximumf %42, %43 : vector<256x256xf32>
    %c0_23 = arith.constant 0 : index
    %c0_24 = arith.constant 0 : index
    %c0_25 = arith.constant 0 : index
    %45 = vector.load %arg5[%c0_23, %c0_24, %c0_25] : memref<2x64x256xf32, #tpu.memory_space<vmem>>, vector<1x64x256xf32>
    %46 = vector.shape_cast %45 : vector<1x64x256xf32> to vector<64x256xf32>
    %cst_26 = arith.constant dense<0.000000e+00> : vector<64x256xf32>
    %47 = tpu.matmul %46, %44, %cst_26 {dimension_numbers = #tpu.dot_dimension_numbers<[1], [0], [0], [1], [0, 0, 1, 1], [], []>} : vector<64x256xf32>, vector<256x256xf32>, vector<64x256xf32> -> vector<64x256xf32>
    %c0_27 = arith.constant 0 : index
    %c5 = arith.constant 5 : index
    %48 = vector.load %arg6[%c0_27, %c5] : memref<256x17xf32, #tpu.memory_space<vmem>>, vector<64x1xf32>
    %49 = vector.broadcast %48 : vector<64x1xf32> to vector<64x256xf32>
    %50 = arith.addf %47, %49 : vector<64x256xf32>
    %51 = arith.addf %36, %50 : vector<64x256xf32>
    %c0_28 = arith.constant 0 : index
    %c6 = arith.constant 6 : index
    %52 = vector.load %arg6[%c0_28, %c6] : memref<256x17xf32, #tpu.memory_space<vmem>>, vector<64x1xf32>
    %c0_29 = arith.constant 0 : index
    %c7 = arith.constant 7 : index
    %53 = vector.load %arg6[%c0_29, %c7] : memref<256x17xf32, #tpu.memory_space<vmem>>, vector<64x1xf32>
    %cst_30 = arith.constant dense<0.000000e+00> : vector<256xf32>
    %54 = vector.multi_reduction <add>, %51, %cst_30 [0] : vector<64x256xf32> to vector<256xf32>
    %55 = vector.shape_cast %54 : vector<256xf32> to vector<1x256xf32>
    %cst_31 = arith.constant 6.400000e+01 : f32
    %56 = vector.broadcast %cst_31 : f32 to vector<1x256xf32>
    %57 = arith.divf %55, %56 : vector<1x256xf32>
    %58 = vector.broadcast %57 : vector<1x256xf32> to vector<64x256xf32>
    %59 = arith.subf %51, %58 : vector<64x256xf32>
    %60 = arith.mulf %59, %59 : vector<64x256xf32>
    %cst_32 = arith.constant dense<0.000000e+00> : vector<256xf32>
    %61 = vector.multi_reduction <add>, %60, %cst_32 [0] : vector<64x256xf32> to vector<256xf32>
    %62 = vector.shape_cast %61 : vector<256xf32> to vector<1x256xf32>
    %cst_33 = arith.constant 6.400000e+01 : f32
    %63 = vector.broadcast %cst_33 : f32 to vector<1x256xf32>
    %64 = arith.divf %62, %63 : vector<1x256xf32>
    %65 = vector.broadcast %57 : vector<1x256xf32> to vector<64x256xf32>
    %66 = arith.subf %51, %65 : vector<64x256xf32>
    %cst_34 = arith.constant 9.99999974E-6 : f32
    %67 = vector.broadcast %cst_34 : f32 to vector<1x256xf32>
    %68 = arith.addf %64, %67 : vector<1x256xf32>
    %69 = math.rsqrt %68 : vector<1x256xf32>
    %70 = vector.broadcast %69 : vector<1x256xf32> to vector<64x256xf32>
    %71 = arith.mulf %66, %70 : vector<64x256xf32>
    %72 = vector.broadcast %52 : vector<64x1xf32> to vector<64x256xf32>
    %73 = arith.mulf %71, %72 : vector<64x256xf32>
    %74 = vector.broadcast %53 : vector<64x1xf32> to vector<64x256xf32>
    %75 = arith.addf %73, %74 : vector<64x256xf32>
    %c1_35 = arith.constant 1 : index
    %c0_36 = arith.constant 0 : index
    %c0_37 = arith.constant 0 : index
    %76 = vector.load %arg3[%c1_35, %c0_36, %c0_37] : memref<2x64x64xf32, #tpu.memory_space<vmem>>, vector<1x64x64xf32>
    %77 = vector.shape_cast %76 : vector<1x64x64xf32> to vector<64x64xf32>
    %cst_38 = arith.constant dense<0.000000e+00> : vector<64x256xf32>
    %78 = tpu.matmul %77, %75, %cst_38 {dimension_numbers = #tpu.dot_dimension_numbers<[1], [0], [0], [1], [0, 0, 1, 1], [], []>} : vector<64x64xf32>, vector<64x256xf32>, vector<64x256xf32> -> vector<64x256xf32>
    %c0_39 = arith.constant 0 : index
    %c8 = arith.constant 8 : index
    %79 = vector.load %arg6[%c0_39, %c8] : memref<256x17xf32, #tpu.memory_space<vmem>>, vector<64x1xf32>
    %80 = vector.broadcast %79 : vector<64x1xf32> to vector<64x256xf32>
    %81 = arith.addf %78, %80 : vector<64x256xf32>
    %82 = arith.addf %75, %81 : vector<64x256xf32>
    %c0_40 = arith.constant 0 : index
    %c9 = arith.constant 9 : index
    %83 = vector.load %arg6[%c0_40, %c9] : memref<256x17xf32, #tpu.memory_space<vmem>>, vector<64x1xf32>
    %c0_41 = arith.constant 0 : index
    %c10 = arith.constant 10 : index
    %84 = vector.load %arg6[%c0_41, %c10] : memref<256x17xf32, #tpu.memory_space<vmem>>, vector<64x1xf32>
    %cst_42 = arith.constant dense<0.000000e+00> : vector<256xf32>
    %85 = vector.multi_reduction <add>, %82, %cst_42 [0] : vector<64x256xf32> to vector<256xf32>
    %86 = vector.shape_cast %85 : vector<256xf32> to vector<1x256xf32>
    %cst_43 = arith.constant 6.400000e+01 : f32
    %87 = vector.broadcast %cst_43 : f32 to vector<1x256xf32>
    %88 = arith.divf %86, %87 : vector<1x256xf32>
    %89 = vector.broadcast %88 : vector<1x256xf32> to vector<64x256xf32>
    %90 = arith.subf %82, %89 : vector<64x256xf32>
    %91 = arith.mulf %90, %90 : vector<64x256xf32>
    %cst_44 = arith.constant dense<0.000000e+00> : vector<256xf32>
    %92 = vector.multi_reduction <add>, %91, %cst_44 [0] : vector<64x256xf32> to vector<256xf32>
    %93 = vector.shape_cast %92 : vector<256xf32> to vector<1x256xf32>
    %cst_45 = arith.constant 6.400000e+01 : f32
    %94 = vector.broadcast %cst_45 : f32 to vector<1x256xf32>
    %95 = arith.divf %93, %94 : vector<1x256xf32>
    %96 = vector.broadcast %88 : vector<1x256xf32> to vector<64x256xf32>
    %97 = arith.subf %82, %96 : vector<64x256xf32>
    %cst_46 = arith.constant 9.99999974E-6 : f32
    %98 = vector.broadcast %cst_46 : f32 to vector<1x256xf32>
    %99 = arith.addf %95, %98 : vector<1x256xf32>
    %100 = math.rsqrt %99 : vector<1x256xf32>
    %101 = vector.broadcast %100 : vector<1x256xf32> to vector<64x256xf32>
    %102 = arith.mulf %97, %101 : vector<64x256xf32>
    %103 = vector.broadcast %83 : vector<64x1xf32> to vector<64x256xf32>
    %104 = arith.mulf %102, %103 : vector<64x256xf32>
    %105 = vector.broadcast %84 : vector<64x1xf32> to vector<64x256xf32>
    %106 = arith.addf %104, %105 : vector<64x256xf32>
    %c1_47 = arith.constant 1 : index
    %c0_48 = arith.constant 0 : index
    %c0_49 = arith.constant 0 : index
    %107 = vector.load %arg4[%c1_47, %c0_48, %c0_49] : memref<2x256x64xf32, #tpu.memory_space<vmem>>, vector<1x256x64xf32>
    %108 = vector.shape_cast %107 : vector<1x256x64xf32> to vector<256x64xf32>
    %cst_50 = arith.constant dense<0.000000e+00> : vector<256x256xf32>
    %109 = tpu.matmul %108, %106, %cst_50 {dimension_numbers = #tpu.dot_dimension_numbers<[1], [0], [0], [1], [0, 0, 1, 1], [], []>} : vector<256x64xf32>, vector<64x256xf32>, vector<256x256xf32> -> vector<256x256xf32>
    %c0_51 = arith.constant 0 : index
    %c11 = arith.constant 11 : index
    %110 = vector.load %arg6[%c0_51, %c11] : memref<256x17xf32, #tpu.memory_space<vmem>>, vector<256x1xf32>
    %111 = vector.broadcast %110 : vector<256x1xf32> to vector<256x256xf32>
    %112 = arith.addf %109, %111 : vector<256x256xf32>
    %cst_52 = arith.constant 0.000000e+00 : f32
    %113 = vector.broadcast %cst_52 : f32 to vector<256x256xf32>
    %114 = arith.maximumf %112, %113 : vector<256x256xf32>
    %c1_53 = arith.constant 1 : index
    %c0_54 = arith.constant 0 : index
    %c0_55 = arith.constant 0 : index
    %115 = vector.load %arg5[%c1_53, %c0_54, %c0_55] : memref<2x64x256xf32, #tpu.memory_space<vmem>>, vector<1x64x256xf32>
    %116 = vector.shape_cast %115 : vector<1x64x256xf32> to vector<64x256xf32>
    %cst_56 = arith.constant dense<0.000000e+00> : vector<64x256xf32>
    %117 = tpu.matmul %116, %114, %cst_56 {dimension_numbers = #tpu.dot_dimension_numbers<[1], [0], [0], [1], [0, 0, 1, 1], [], []>} : vector<64x256xf32>, vector<256x256xf32>, vector<64x256xf32> -> vector<64x256xf32>
    %c0_57 = arith.constant 0 : index
    %c12 = arith.constant 12 : index
    %118 = vector.load %arg6[%c0_57, %c12] : memref<256x17xf32, #tpu.memory_space<vmem>>, vector<64x1xf32>
    %119 = vector.broadcast %118 : vector<64x1xf32> to vector<64x256xf32>
    %120 = arith.addf %117, %119 : vector<64x256xf32>
    %121 = arith.addf %106, %120 : vector<64x256xf32>
    %cst_58 = arith.constant dense<0.000000e+00> : vector<256xf32>
    %122 = vector.multi_reduction <add>, %121, %cst_58 [0] : vector<64x256xf32> to vector<256xf32>
    %123 = vector.shape_cast %122 : vector<256xf32> to vector<1x256xf32>
    %cst_59 = arith.constant 6.400000e+01 : f32
    %124 = vector.broadcast %cst_59 : f32 to vector<1x256xf32>
    %125 = arith.divf %123, %124 : vector<1x256xf32>
    %126 = vector.broadcast %125 : vector<1x256xf32> to vector<64x256xf32>
    %127 = arith.subf %121, %126 : vector<64x256xf32>
    %128 = arith.mulf %127, %127 : vector<64x256xf32>
    %cst_60 = arith.constant dense<0.000000e+00> : vector<256xf32>
    %129 = vector.multi_reduction <add>, %128, %cst_60 [0] : vector<64x256xf32> to vector<256xf32>
    %130 = vector.shape_cast %129 : vector<256xf32> to vector<1x256xf32>
    %cst_61 = arith.constant 6.400000e+01 : f32
    %131 = vector.broadcast %cst_61 : f32 to vector<1x256xf32>
    %132 = arith.divf %130, %131 : vector<1x256xf32>
    %133 = vector.broadcast %125 : vector<1x256xf32> to vector<64x256xf32>
    %134 = arith.subf %121, %133 : vector<64x256xf32>
    %cst_62 = arith.constant 9.99999974E-6 : f32
    %135 = vector.broadcast %cst_62 : f32 to vector<1x256xf32>
    %136 = arith.addf %132, %135 : vector<1x256xf32>
    %137 = math.rsqrt %136 : vector<1x256xf32>
    %138 = vector.broadcast %137 : vector<1x256xf32> to vector<64x256xf32>
    %139 = arith.mulf %134, %138 : vector<64x256xf32>
    %c0_63 = arith.constant 0 : index
    %c15 = arith.constant 15 : index
    %140 = vector.load %arg6[%c0_63, %c15] : memref<256x17xf32, #tpu.memory_space<vmem>>, vector<64x1xf32>
    %141 = vector.broadcast %140 : vector<64x1xf32> to vector<64x256xf32>
    %142 = arith.mulf %139, %141 : vector<64x256xf32>
    %cst_64 = arith.constant dense<0.000000e+00> : vector<256xf32>
    %143 = vector.multi_reduction <add>, %142, %cst_64 [0] : vector<64x256xf32> to vector<256xf32>
    %144 = vector.shape_cast %143 : vector<256xf32> to vector<1x256xf32>
    %c0_65 = arith.constant 0 : index
    %c16 = arith.constant 16 : index
    %145 = vector.load %arg6[%c0_65, %c16] : memref<256x17xf32, #tpu.memory_space<vmem>>, vector<1x1xf32>
    %146 = vector.broadcast %145 : vector<1x1xf32> to vector<1x256xf32>
    %147 = arith.addf %144, %146 : vector<1x256xf32>
    %148 = arith.negf %147 : vector<1x256xf32>
    %149 = math.exp %148 : vector<1x256xf32>
    %cst_66 = arith.constant 1.000000e+00 : f32
    %150 = vector.broadcast %cst_66 : f32 to vector<1x256xf32>
    %151 = arith.addf %150, %149 : vector<1x256xf32>
    %152 = arith.divf %150, %151 : vector<1x256xf32>
    %c0_67 = arith.constant 0 : index
    %c0_68 = arith.constant 0 : index
    %153 = vector.load %arg7[%c0_67, %c0_68] : memref<1x256xf32, #tpu.memory_space<vmem>>, vector<1x256xf32>
    tpu.vector_store %arg7[%c0_67, %c0_68], %152 {strides = array<i32>} : memref<1x256xf32, #tpu.memory_space<vmem>>, vector<1x256xf32>,
    return
  }
  func.func @transform_0(%arg0: i32) -> (i32, i32) {
    %c0_i32 = arith.constant 0 : i32
    %c0_i32_0 = arith.constant 0 : i32
    return %c0_i32, %arg0 : i32, i32
  }
  func.func @transform_1(%arg0: i32) -> (i32, i32) {
    %c0_i32 = arith.constant 0 : i32
    %c0_i32_0 = arith.constant 0 : i32
    %c0_i32_1 = arith.constant 0 : i32
    return %c0_i32, %c0_i32_0 : i32, i32
  }
  func.func @transform_2(%arg0: i32) -> (i32, i32, i32) {
    %c0_i32 = arith.constant 0 : i32
    %c0_i32_0 = arith.constant 0 : i32
    %c0_i32_1 = arith.constant 0 : i32
    %c0_i32_2 = arith.constant 0 : i32
    return %c0_i32, %c0_i32_0, %c0_i32_1 : i32, i32, i32
  }
  func.func @transform_3(%arg0: i32) -> (i32, i32, i32) {
    %c0_i32 = arith.constant 0 : i32
    %c0_i32_0 = arith.constant 0 : i32
    %c0_i32_1 = arith.constant 0 : i32
    %c0_i32_2 = arith.constant 0 : i32
    return %c0_i32, %c0_i32_0, %c0_i32_1 : i32, i32, i32
  }
  func.func @transform_4(%arg0: i32) -> (i32, i32, i32) {
    %c0_i32 = arith.constant 0 : i32
    %c0_i32_0 = arith.constant 0 : i32
    %c0_i32_1 = arith.constant 0 : i32
    %c0_i32_2 = arith.constant 0 : i32
    return %c0_i32, %c0_i32_0, %c0_i32_1 : i32, i32, i32
  }
  func.func @transform_5(%arg0: i32) -> (i32, i32) {
    %c0_i32 = arith.constant 0 : i32
    %c0_i32_0 = arith.constant 0 : i32
    %c0_i32_1 = arith.constant 0 : i32
    return %c0_i32, %c0_i32_0 : i32, i32
  }
  func.func @transform_6(%arg0: i32) -> (i32, i32) {
    %c0_i32 = arith.constant 0 : i32
    %c0_i32_0 = arith.constant 0 : i32
    return %c0_i32, %arg0 : i32, i32
  }
}

</mosaic_0001>

<llo_original>
// kernel: tpu_custom_call.1
$region0: #{tpu_custom_call.1}
  #allocation0 [shape = 'u32[]', space=smem, size = 0x4, offset = 0x4, fixed_abs, tag = 'smem constant byte address 0x4 - core index']
  #allocation1 [shape = 'u32[144,128]{1,0:T(1,128)}', space=vmem, size = 0x12000, scoped, tag = 'internal scratch']
  %s0 = inlined_call_operand.vmem [shape: f32[16,256], index: 0, kind: input, shape index: {}]
  %s1 = inlined_call_operand.vmem [shape: f32[64,16], index: 1, kind: input, shape index: {}]
  %s2 = inlined_call_operand.vmem [shape: f32[2,64,64], index: 2, kind: input, shape index: {}]
  %s3 = inlined_call_operand.vmem [shape: f32[2,256,64], index: 3, kind: input, shape index: {}]
  %s4 = inlined_call_operand.vmem [shape: f32[2,64,256], index: 4, kind: input, shape index: {}]
  %s5 = inlined_call_operand.vmem [shape: f32[256,17], index: 5, kind: input, shape index: {}]
  %s6 = inlined_call_operand.hbm [shape: f32[1,256], index: 6, kind: output, shape index: {}]
  %s7 = sld [smem:[#allocation0]]
  $region34: #{tpu_custom_call.1} parent=0
    _
  %s9 = ssub.s32 1, %s7
  %s10 = scalar_select 0, %s9, %s7
  $region1: #{tpu_custom_call.1} parent=0
    #allocation2 [shape = 'u8[1024]{0}', space=vmem, size = 0x400, scoped, tag = 'output window, operand 0, single buffered']
    #allocation3 [shape = 's32[1]{0}', space=sflag, size = 0x4, scoped, tag = 'scoped memory for tpu_custom_call.1']
    %11 = vsyncpa [#allocation3], 0
    // Predicated region
    $region2: #{tpu_custom_call.1} parent=1 // pred_check
      _
    $region3: #{tpu_custom_call.1} parent=1 // pred_check_branch
      %13 = sbr.rel (0) target = $region5
    $region4: #{tpu_custom_call.1} parent=1 // pred_region
      _
    $region5: #{tpu_custom_call.1} parent=1 // pred_fallthru
      _
    // Predicated region
    $region6: #{tpu_custom_call.1} parent=1 // pred_check
      _
    $region7: #{tpu_custom_call.1} parent=1 // pred_check_branch
      %15 = sbr.rel (0) target = $region9
    $region8: #{tpu_custom_call.1} parent=1 // pred_region
      _
    $region9: #{tpu_custom_call.1} parent=1 // pred_fallthru
      _
    // Predicated region
    $region10: #{tpu_custom_call.1} parent=1 // pred_check
      _
    $region11: #{tpu_custom_call.1} parent=1 // pred_check_branch
      %17 = sbr.rel (0) target = $region13
    $region12: #{tpu_custom_call.1} parent=1 // pred_region
      _
    $region13: #{tpu_custom_call.1} parent=1 // pred_fallthru
      _
    // Predicated region
    $region14: #{tpu_custom_call.1} parent=1 // pred_check
      _
    $region15: #{tpu_custom_call.1} parent=1 // pred_check_branch
      %19 = sbr.rel (0) target = $region17
    $region16: #{tpu_custom_call.1} parent=1 // pred_region
      _
    $region17: #{tpu_custom_call.1} parent=1 // pred_fallthru
      _
    // Predicated region
    $region18: #{tpu_custom_call.1} parent=1 // pred_check
      _
    $region19: #{tpu_custom_call.1} parent=1 // pred_check_branch
      %21 = sbr.rel (0) target = $region21
    $region20: #{tpu_custom_call.1} parent=1 // pred_region
      _
    $region21: #{tpu_custom_call.1} parent=1 // pred_fallthru
      _
    // Predicated region
    $region22: #{tpu_custom_call.1} parent=1 // pred_check
      _
    $region23: #{tpu_custom_call.1} parent=1 // pred_check_branch
      %23 = sbr.rel (0) target = $region25
    $region24: #{tpu_custom_call.1} parent=1 // pred_region
      _
    $region25: #{tpu_custom_call.1} parent=1 // pred_fallthru
      _
    %v24 = vld [vmem:[%s1] sm:$0xff]
    %v25 = vld [vmem:[%s1 + $0x8] sm:$0xff]
    %v26 = vld [vmem:[%s1 + $0x10] sm:$0xff]
    %v27 = vld [vmem:[%s1 + $0x18] sm:$0xff]
    %v28 = vld [vmem:[%s1 + $0x20] sm:$0xff]
    %v29 = vld [vmem:[%s1 + $0x28] sm:$0xff]
    %v30 = vld [vmem:[%s1 + $0x30] sm:$0xff]
    %v31 = vld [vmem:[%s1 + $0x38] sm:$0xff]
    %v32 = vld [vmem:[%s0] sm:$0xff]
    %v33 = vld [vmem:[%s0 + $0x8] sm:$0xff]
    %v34 = vld [vmem:[%s0 + $0x10] sm:$0xff]
    %v35 = vld [vmem:[%s0 + $0x18] sm:$0xff]
    %v36 = vld [vmem:[%s5] sm:$0xff]
    %v37 = vld [vmem:[%s5 + $0x8] sm:$0xff]
    %v38 = vld [vmem:[%s5 + $0x10] sm:$0xff]
    %v39 = vld [vmem:[%s5 + $0x18] sm:$0xff]
    %v40 = vld [vmem:[%s5 + $0x20] sm:$0xff]
    %v41 = vld [vmem:[%s5 + $0x28] sm:$0xff]
    %v42 = vld [vmem:[%s5 + $0x30] sm:$0xff]
    %v43 = vld [vmem:[%s5 + $0x38] sm:$0xff]
    %45 = vset.pattern.permute.xlu0 0
    %46 = vperm.xlu0 %45, %v36
    %v47 = vpop.permute.xlu0 %46
    %50 = vset.pattern.permute.xlu0 0
    %51 = vperm.xlu0 %50, %v37
    %v52 = vpop.permute.xlu0 %51
    %55 = vset.pattern.permute.xlu0 0
    %56 = vperm.xlu0 %55, %v38
    %v57 = vpop.permute.xlu0 %56
    %60 = vset.pattern.permute.xlu0 0
    %61 = vperm.xlu0 %60, %v39
    %v62 = vpop.permute.xlu0 %61
    %65 = vset.pattern.permute.xlu0 0
    %66 = vperm.xlu0 %65, %v40
    %v67 = vpop.permute.xlu0 %66
    %70 = vset.pattern.permute.xlu0 0
    %71 = vperm.xlu0 %70, %v41
    %v72 = vpop.permute.xlu0 %71
    %75 = vset.pattern.permute.xlu0 0
    %76 = vperm.xlu0 %75, %v42
    %v77 = vpop.permute.xlu0 %76
    %80 = vset.pattern.permute.xlu0 0
    %81 = vperm.xlu0 %80, %v43
    %v82 = vpop.permute.xlu0 %81
    %vm84 = vcmask 130048
    %v86 = vsel %vm84, %v24, 0
    %v89 = vsel %vm84, %v25, 0
    %v92 = vsel %vm84, %v26, 0
    %v95 = vsel %vm84, %v27, 0
    %v98 = vsel %vm84, %v28, 0
    %v101 = vsel %vm84, %v29, 0
    %v104 = vsel %vm84, %v30, 0
    %v107 = vsel %vm84, %v31, 0
    %109 = vmatprep.subr.mxu0 %v33
    %110 = vmatpush1.msra.mxu0 %v32
    %111 = vmatprep.subr.mxu0 %v35
    %112 = vmatpush1.msra.mxu0 %v34
    %113 = vmatprep.subr.mxu0 0.0
    %114 = vmatpush1.msra.mxu0 0.0
    %115 = vmatprep.subr.mxu0 0.0
    %116 = vmatpush1.msra.mxu0 0.0
    %117 = vmatprep.subr.mxu0 0.0
    %118 = vmatpush1.msra.mxu0 0.0
    %119 = vmatprep.subr.mxu0 0.0
    %120 = vmatpush1.msra.mxu0 0.0
    %121 = vmatprep.subr.mxu0 0.0
    %122 = vmatpush1.msra.mxu0 0.0
    %123 = vmatprep.subr.mxu0 0.0
    %124 = vmatpush1.msra.mxu0 0.0
    %125 = vmatprep.subr.mxu0 0.0
    %126 = vmatpush1.msra.mxu0 0.0
    %127 = vmatprep.subr.mxu0 0.0
    %128 = vmatpush1.msra.mxu0 0.0
    %129 = vmatprep.subr.mxu0 0.0
    %130 = vmatpush1.msra.mxu0 0.0
    %131 = vmatprep.subr.mxu0 0.0
    %132 = vmatpush1.msra.mxu0 0.0
    %133 = vmatprep.subr.mxu0 0.0
    %134 = vmatpush1.msra.mxu0 0.0
    %135 = vmatprep.subr.mxu0 0.0
    %136 = vmatpush1.msra.mxu0 0.0
    %137 = vmatprep.subr.mxu0 0.0
    %138 = vmatpush1.msra.mxu0 0.0
    %139 = vmatprep.subr.mxu0 0.0
    %140 = vmatpush1.msra.mxu0 0.0
    %141 = vmatprep.subr.mxu0 0.0
    %142 = vmatpush1.msra.mxu0 0.0
    %143 = vmatprep.subr.mxu0 0.0
    %144 = vmatpush1.msra.mxu0 0.0
    %145 = vmatprep.subr.mxu0 0.0
    %146 = vmatpush1.msra.mxu0 0.0
    %147 = vmatprep.subr.mxu0 0.0
    %148 = vmatpush1.msra.mxu0 0.0
    %149 = vmatprep.subr.mxu0 0.0
    %150 = vmatpush1.msra.mxu0 0.0
    %151 = vmatprep.subr.mxu0 0.0
    %152 = vmatpush1.msra.mxu0 0.0
    %153 = vmatprep.subr.mxu0 0.0
    %154 = vmatpush1.msra.mxu0 0.0
    %155 = vmatprep.subr.mxu0 0.0
    %156 = vmatpush1.msra.mxu0 0.0
    %157 = vmatprep.subr.mxu0 0.0
    %158 = vmatpush1.msra.mxu0 0.0
    %159 = vmatprep.subr.mxu0 0.0
    %160 = vmatpush1.msra.mxu0 0.0
    %161 = vmatprep.subr.mxu0 0.0
    %162 = vmatpush1.msra.mxu0 0.0
    %163 = vmatprep.subr.mxu0 0.0
    %164 = vmatpush1.msra.mxu0 0.0
    %165 = vmatprep.subr.mxu0 0.0
    %166 = vmatpush1.msra.mxu0 0.0
    %167 = vmatprep.subr.mxu0 0.0
    %168 = vmatpush1.msra.mxu0 0.0
    %169 = vmatprep.subr.mxu0 0.0
    %170 = vmatpush1.msra.mxu0 0.0
    %171 = vmatprep.subr.mxu0 0.0
    %172 = vmatpush1.msra.mxu0 0.0
    %173 = vmatprep.mubr.f32.mxu0 0.0
    %174 = vmatmul.mubr.f32.gmra.mrb[0].mxu0 %v86
    %v175 = vpop.f32.mrb[0].mxu0
    %v176 = vadd.f32 %v47, %v175
    %v177 = vpop.f32.mrb[0].mxu0
    %v178 = vadd.f32 %v47, %v177
    %179 = vmatprep.mubr.f32.mxu0 0.0
    %180 = vmatmul.mubr.f32.gmra.mrb[0].mxu0 %v89
    %v181 = vpop.f32.mrb[0].mxu0
    %v182 = vadd.f32 %v52, %v181
    %v183 = vpop.f32.mrb[0].mxu0
    %v184 = vadd.f32 %v52, %v183
    %185 = vmatprep.mubr.f32.mxu0 0.0
    %186 = vmatmul.mubr.f32.gmra.mrb[0].mxu0 %v92
    %v187 = vpop.f32.mrb[0].mxu0
    %v188 = vadd.f32 %v57, %v187
    %v189 = vpop.f32.mrb[0].mxu0
    %v190 = vadd.f32 %v57, %v189
    %191 = vmatprep.mubr.f32.mxu0 0.0
    %192 = vmatmul.mubr.f32.gmra.mrb[0].mxu0 %v95
    %v193 = vpop.f32.mrb[0].mxu0
    %v194 = vadd.f32 %v62, %v193
    %v195 = vpop.f32.mrb[0].mxu0
    %v196 = vadd.f32 %v62, %v195
    %197 = vmatprep.mubr.f32.mxu0 0.0
    %198 = vmatmul.mubr.f32.gmra.mrb[0].mxu0 %v98
    %v199 = vpop.f32.mrb[0].mxu0
    %v200 = vadd.f32 %v67, %v199
    %v201 = vpop.f32.mrb[0].mxu0
    %v202 = vadd.f32 %v67, %v201
    %203 = vmatprep.mubr.f32.mxu0 0.0
    %204 = vmatmul.mubr.f32.gmra.mrb[0].mxu0 %v101
    %v205 = vpop.f32.mrb[0].mxu0
    %v206 = vadd.f32 %v72, %v205
    %v207 = vpop.f32.mrb[0].mxu0
    %v208 = vadd.f32 %v72, %v207
    %209 = vmatprep.mubr.f32.mxu0 0.0
    %210 = vmatmul.mubr.f32.gmra.mrb[0].mxu0 %v104
    %v211 = vpop.f32.mrb[0].mxu0
    %v212 = vadd.f32 %v77, %v211
    %v213 = vpop.f32.mrb[0].mxu0
    %v214 = vadd.f32 %v77, %v213
    %215 = vmatprep.mubr.f32.mxu0 0.0
    %216 = vmatmul.mubr.f32.gmra.mrb[0].mxu0 %v107
    %v217 = vpop.f32.mrb[0].mxu0
    %v218 = vadd.f32 %v82, %v217
    %v219 = vpop.f32.mrb[0].mxu0
    %v220 = vadd.f32 %v82, %v219
    %221 = vdwg.mxu0
    %v222 = vld [vmem:[%s2] sm:$0xff]
    %v223 = vld [vmem:[%s2 + $0x8] sm:$0xff]
    %v224 = vld [vmem:[%s2 + $0x10] sm:$0xff]
    %v225 = vld [vmem:[%s2 + $0x18] sm:$0xff]
    %v226 = vld [vmem:[%s2 + $0x20] sm:$0xff]
    %v227 = vld [vmem:[%s2 + $0x28] sm:$0xff]
    %v228 = vld [vmem:[%s2 + $0x30] sm:$0xff]
    %v229 = vld [vmem:[%s2 + $0x38] sm:$0xff]
    %230 = vset.pattern.permute.xlu0 1
    %231 = vperm.xlu0 %230, %v36
    %v232 = vpop.permute.xlu0 %231
    %234 = vset.pattern.permute.xlu0 1
    %235 = vperm.xlu0 %234, %v37
    %v236 = vpop.permute.xlu0 %235
    %238 = vset.pattern.permute.xlu0 1
    %239 = vperm.xlu0 %238, %v38
    %v240 = vpop.permute.xlu0 %239
    %242 = vset.pattern.permute.xlu0 1
    %243 = vperm.xlu0 %242, %v39
    %v244 = vpop.permute.xlu0 %243
    %246 = vset.pattern.permute.xlu0 1
    %247 = vperm.xlu0 %246, %v40
    %v248 = vpop.permute.xlu0 %247
    %250 = vset.pattern.permute.xlu0 1
    %251 = vperm.xlu0 %250, %v41
    %v252 = vpop.permute.xlu0 %251
    %254 = vset.pattern.permute.xlu0 1
    %255 = vperm.xlu0 %254, %v42
    %v256 = vpop.permute.xlu0 %255
    %258 = vset.pattern.permute.xlu0 1
    %259 = vperm.xlu0 %258, %v43
    %v260 = vpop.permute.xlu0 %259
    %vm262 = vcmask 523264
    %v264 = vsel %vm262, %v222, 0
    %v267 = vsel %vm262, %v223, 0
    %v270 = vsel %vm262, %v224, 0
    %v273 = vsel %vm262, %v225, 0
    %v276 = vsel %vm262, %v226, 0
    %v279 = vsel %vm262, %v227, 0
    %v282 = vsel %vm262, %v228, 0
    %v285 = vsel %vm262, %v229, 0
    %287 = vmatprep.subr.mxu0 %v178
    %288 = vmatpush1.msra.mxu0 %v176
    %289 = vmatprep.subr.mxu0 %v184
    %290 = vmatpush1.msra.mxu0 %v182
    %291 = vmatprep.subr.mxu0 %v190
    %292 = vmatpush1.msra.mxu0 %v188
    %293 = vmatprep.subr.mxu0 %v196
    %294 = vmatpush1.msra.mxu0 %v194
    %295 = vmatprep.subr.mxu0 %v202
    %296 = vmatpush1.msra.mxu0 %v200
    %297 = vmatprep.subr.mxu0 %v208
    %298 = vmatpush1.msra.mxu0 %v206
    %299 = vmatprep.subr.mxu0 %v214
    %300 = vmatpush1.msra.mxu0 %v212
    %301 = vmatprep.subr.mxu0 %v220
    %302 = vmatpush1.msra.mxu0 %v218
    %303 = vmatprep.subr.mxu0 0.0
    %304 = vmatpush1.msra.mxu0 0.0
    %305 = vmatprep.subr.mxu0 0.0
    %306 = vmatpush1.msra.mxu0 0.0
    %307 = vmatprep.subr.mxu0 0.0
    %308 = vmatpush1.msra.mxu0 0.0
    %309 = vmatprep.subr.mxu0 0.0
    %310 = vmatpush1.msra.mxu0 0.0
    %311 = vmatprep.subr.mxu0 0.0
    %312 = vmatpush1.msra.mxu0 0.0
    %313 = vmatprep.subr.mxu0 0.0
    %314 = vmatpush1.msra.mxu0 0.0
    %315 = vmatprep.subr.mxu0 0.0
    %316 = vmatpush1.msra.mxu0 0.0
    %317 = vmatprep.subr.mxu0 0.0
    %318 = vmatpush1.msra.mxu0 0.0
    %319 = vmatprep.subr.mxu0 0.0
    %320 = vmatpush1.msra.mxu0 0.0
    %321 = vmatprep.subr.mxu0 0.0
    %322 = vmatpush1.msra.mxu0 0.0
    %323 = vmatprep.subr.mxu0 0.0
    %324 = vmatpush1.msra.mxu0 0.0
    %325 = vmatprep.subr.mxu0 0.0
    %326 = vmatpush1.msra.mxu0 0.0
    %327 = vmatprep.subr.mxu0 0.0
    %328 = vmatpush1.msra.mxu0 0.0
    %329 = vmatprep.subr.mxu0 0.0
    %330 = vmatpush1.msra.mxu0 0.0
    %331 = vmatprep.subr.mxu0 0.0
    %332 = vmatpush1.msra.mxu0 0.0
    %333 = vmatprep.subr.mxu0 0.0
    %334 = vmatpush1.msra.mxu0 0.0
    %335 = vmatprep.subr.mxu0 0.0
    %336 = vmatpush1.msra.mxu0 0.0
    %337 = vmatprep.subr.mxu0 0.0
    %338 = vmatpush1.msra.mxu0 0.0
    %339 = vmatprep.subr.mxu0 0.0
    %340 = vmatpush1.msra.mxu0 0.0
    %341 = vmatprep.subr.mxu0 0.0
    %342 = vmatpush1.msra.mxu0 0.0
    %343 = vmatprep.subr.mxu0 0.0
    %344 = vmatpush1.msra.mxu0 0.0
    %345 = vmatprep.subr.mxu0 0.0
    %346 = vmatpush1.msra.mxu0 0.0
    %347 = vmatprep.subr.mxu0 0.0
    %348 = vmatpush1.msra.mxu0 0.0
    %349 = vmatprep.subr.mxu0 0.0
    %350 = vmatpush1.msra.mxu0 0.0
    %351 = vmatprep.mubr.f32.mxu0 0.0
    %352 = vmatmul.mubr.f32.gmra.mrb[0].mxu0 %v264
    %v353 = vpop.f32.mrb[0].mxu0
    %v354 = vadd.f32 %v232, %v353
    %v355 = vpop.f32.mrb[0].mxu0
    %v356 = vadd.f32 %v232, %v355
    %357 = vmatprep.mubr.f32.mxu0 0.0
    %358 = vmatmul.mubr.f32.gmra.mrb[0].mxu0 %v267
    %v359 = vpop.f32.mrb[0].mxu0
    %v360 = vadd.f32 %v236, %v359
    %v361 = vpop.f32.mrb[0].mxu0
    %v362 = vadd.f32 %v236, %v361
    %363 = vmatprep.mubr.f32.mxu0 0.0
    %364 = vmatmul.mubr.f32.gmra.mrb[0].mxu0 %v270
    %v365 = vpop.f32.mrb[0].mxu0
    %v366 = vadd.f32 %v240, %v365
    %v367 = vpop.f32.mrb[0].mxu0
    %v368 = vadd.f32 %v240, %v367
    %369 = vmatprep.mubr.f32.mxu0 0.0
    %370 = vmatmul.mubr.f32.gmra.mrb[0].mxu0 %v273
    %v371 = vpop.f32.mrb[0].mxu0
    %v372 = vadd.f32 %v244, %v371
    %v373 = vpop.f32.mrb[0].mxu0
    %v374 = vadd.f32 %v244, %v373
    %375 = vmatprep.mubr.f32.mxu0 0.0
    %376 = vmatmul.mubr.f32.gmra.mrb[0].mxu0 %v276
    %v377 = vpop.f32.mrb[0].mxu0
    %v378 = vadd.f32 %v248, %v377
    %v379 = vpop.f32.mrb[0].mxu0
    %v380 = vadd.f32 %v248, %v379
    %381 = vmatprep.mubr.f32.mxu0 0.0
    %382 = vmatmul.mubr.f32.gmra.mrb[0].mxu0 %v279
    %v383 = vpop.f32.mrb[0].mxu0
    %v384 = vadd.f32 %v252, %v383
    %v385 = vpop.f32.mrb[0].mxu0
    %v386 = vadd.f32 %v252, %v385
    %387 = vmatprep.mubr.f32.mxu0 0.0
    %388 = vmatmul.mubr.f32.gmra.mrb[0].mxu0 %v282
    %v389 = vpop.f32.mrb[0].mxu0
    %v390 = vadd.f32 %v256, %v389
    %v391 = vpop.f32.mrb[0].mxu0
    %v392 = vadd.f32 %v256, %v391
    %393 = vmatprep.mubr.f32.mxu0 0.0
    %394 = vmatmul.mubr.f32.gmra.mrb[0].mxu0 %v285
    %v395 = vpop.f32.mrb[0].mxu0
    %v396 = vadd.f32 %v260, %v395
    %v397 = vpop.f32.mrb[0].mxu0
    %v398 = vadd.f32 %v260, %v397
    %399 = vdwg.mxu0
    %v400 = vadd.f32 %v176, %v354
    %v401 = vadd.f32 %v178, %v356
    %v402 = vadd.f32 %v182, %v360
    %v403 = vadd.f32 %v184, %v362
    %v404 = vadd.f32 %v188, %v366
    %v405 = vadd.f32 %v190, %v368
    %v406 = vadd.f32 %v194, %v372
    %v407 = vadd.f32 %v196, %v374
    %v408 = vadd.f32 %v200, %v378
    %v409 = vadd.f32 %v202, %v380
    %v410 = vadd.f32 %v206, %v384
    %v411 = vadd.f32 %v208, %v386
    %v412 = vadd.f32 %v212, %v390
    %v413 = vadd.f32 %v214, %v392
    %v414 = vadd.f32 %v218, %v396
    %v415 = vadd.f32 %v220, %v398
    %v416 = vadd.f32 %v400, %v402
    %v417 = vadd.f32 %v416, %v404
    %v418 = vadd.f32 %v417, %v406
    %v419 = vadd.f32 %v418, %v408
    %v420 = vadd.f32 %v419, %v410
    %v421 = vadd.f32 %v420, %v412
    %v422 = vadd.f32 %v421, %v414
    %v423 = vrot.slane %v422, 4
    %v424 = vadd.f32 %v422, %v423
    %v425 = vrot.slane %v424, 2
    %v426 = vadd.f32 %v424, %v425
    %v427 = vrot.slane %v426, 1
    %v428 = vadd.f32 %v426, %v427
    %v429 = vadd.f32 %v401, %v403
    %v430 = vadd.f32 %v429, %v405
    %v431 = vadd.f32 %v430, %v407
    %v432 = vadd.f32 %v431, %v409
    %v433 = vadd.f32 %v432, %v411
    %v434 = vadd.f32 %v433, %v413
    %v435 = vadd.f32 %v434, %v415
    %v436 = vrot.slane %v435, 4
    %v437 = vadd.f32 %v435, %v436
    %v438 = vrot.slane %v437, 2
    %v439 = vadd.f32 %v437, %v438
    %v440 = vrot.slane %v439, 1
    %v441 = vadd.f32 %v439, %v440
    %v442 = vrcp.pop 64.0
    %v443 = vmul.f32 %v428, %v442
    %v444 = vmul.f32 %v441, %v442
    %v445 = vsub.f32 %v400, %v443
    %v446 = vsub.f32 %v401, %v444
    %v447 = vsub.f32 %v402, %v443
    %v448 = vsub.f32 %v403, %v444
    %v449 = vsub.f32 %v404, %v443
    %v450 = vsub.f32 %v405, %v444
    %v451 = vsub.f32 %v406, %v443
    %v452 = vsub.f32 %v407, %v444
    %v453 = vsub.f32 %v408, %v443
    %v454 = vsub.f32 %v409, %v444
    %v455 = vsub.f32 %v410, %v443
    %v456 = vsub.f32 %v411, %v444
    %v457 = vsub.f32 %v412, %v443
    %v458 = vsub.f32 %v413, %v444
    %v459 = vsub.f32 %v414, %v443
    %v460 = vsub.f32 %v415, %v444
    %v461 = vmul.f32 %v445, %v445
    %v462 = vmul.f32 %v446, %v446
    %v463 = vmul.f32 %v447, %v447
    %v464 = vmul.f32 %v448, %v448
    %v465 = vmul.f32 %v449, %v449
    %v466 = vmul.f32 %v450, %v450
    %v467 = vmul.f32 %v451, %v451
    %v468 = vmul.f32 %v452, %v452
    %v469 = vmul.f32 %v453, %v453
    %v470 = vmul.f32 %v454, %v454
    %v471 = vmul.f32 %v455, %v455
    %v472 = vmul.f32 %v456, %v456
    %v473 = vmul.f32 %v457, %v457
    %v474 = vmul.f32 %v458, %v458
    %v475 = vmul.f32 %v459, %v459
    %v476 = vmul.f32 %v460, %v460
    %v477 = vadd.f32 %v461, %v463
    %v478 = vadd.f32 %v477, %v465
    %v479 = vadd.f32 %v478, %v467
    %v480 = vadd.f32 %v479, %v469
    %v481 = vadd.f32 %v480, %v471
    %v482 = vadd.f32 %v481, %v473
    %v483 = vadd.f32 %v482, %v475
    %v484 = vrot.slane %v483, 4
    %v485 = vadd.f32 %v483, %v484
    %v486 = vrot.slane %v485, 2
    %v487 = vadd.f32 %v485, %v486
    %v488 = vrot.slane %v487, 1
    %v489 = vadd.f32 %v487, %v488
    %v490 = vadd.f32 %v462, %v464
    %v491 = vadd.f32 %v490, %v466
    %v492 = vadd.f32 %v491, %v468
    %v493 = vadd.f32 %v492, %v470
    %v494 = vadd.f32 %v493, %v472
    %v495 = vadd.f32 %v494, %v474
    %v496 = vadd.f32 %v495, %v476
    %v497 = vrot.slane %v496, 4
    %v498 = vadd.f32 %v496, %v497
    %v499 = vrot.slane %v498, 2
    %v500 = vadd.f32 %v498, %v499
    %v501 = vrot.slane %v500, 1
    %v502 = vadd.f32 %v500, %v501
    %v503 = vmul.f32 %v489, %v442
    %v504 = vmul.f32 %v502, %v442
    %v505 = vadd.f32 %v503, 1e-05
    %v506 = vadd.f32 %v504, 1e-05
    %v507 = vrsqrt.pop %v505
    %v508 = vrsqrt.pop %v506
    %v509 = vmul.f32 %v445, %v507
    %v510 = vmul.f32 %v446, %v508
    %v511 = vmul.f32 %v447, %v507
    %v512 = vmul.f32 %v448, %v508
    %v513 = vmul.f32 %v449, %v507
    %v514 = vmul.f32 %v450, %v508
    %v515 = vmul.f32 %v451, %v507
    %v516 = vmul.f32 %v452, %v508
    %v517 = vmul.f32 %v453, %v507
    %v518 = vmul.f32 %v454, %v508
    %v519 = vmul.f32 %v455, %v507
    %v520 = vmul.f32 %v456, %v508
    %v521 = vmul.f32 %v457, %v507
    %v522 = vmul.f32 %v458, %v508
    %v523 = vmul.f32 %v459, %v507
    %v524 = vmul.f32 %v460, %v508
    %525 = vset.pattern.permute.xlu0 2
    %526 = vperm.xlu0 %525, %v36
    %v527 = vpop.permute.xlu0 %526
    %529 = vset.pattern.permute.xlu0 2
    %530 = vperm.xlu0 %529, %v37
    %v531 = vpop.permute.xlu0 %530
    %533 = vset.pattern.permute.xlu0 2
    %534 = vperm.xlu0 %533, %v38
    %v535 = vpop.permute.xlu0 %534
    %537 = vset.pattern.permute.xlu0 2
    %538 = vperm.xlu0 %537, %v39
    %v539 = vpop.permute.xlu0 %538
    %541 = vset.pattern.permute.xlu0 2
    %542 = vperm.xlu0 %541, %v40
    %v543 = vpop.permute.xlu0 %542
    %545 = vset.pattern.permute.xlu0 2
    %546 = vperm.xlu0 %545, %v41
    %v547 = vpop.permute.xlu0 %546
    %549 = vset.pattern.permute.xlu0 2
    %550 = vperm.xlu0 %549, %v42
    %v551 = vpop.permute.xlu0 %550
    %553 = vset.pattern.permute.xlu0 2
    %554 = vperm.xlu0 %553, %v43
    %v555 = vpop.permute.xlu0 %554
    %v557 = vmul.f32 %v509, %v527
    %v558 = vmul.f32 %v510, %v527
    %v559 = vmul.f32 %v511, %v531
    %v560 = vmul.f32 %v512, %v531
    %v561 = vmul.f32 %v513, %v535
    %v562 = vmul.f32 %v514, %v535
    %v563 = vmul.f32 %v515, %v539
    %v564 = vmul.f32 %v516, %v539
    %v565 = vmul.f32 %v517, %v543
    %v566 = vmul.f32 %v518, %v543
    %v567 = vmul.f32 %v519, %v547
    %v568 = vmul.f32 %v520, %v547
    %v569 = vmul.f32 %v521, %v551
    %v570 = vmul.f32 %v522, %v551
    %v571 = vmul.f32 %v523, %v555
    %v572 = vmul.f32 %v524, %v555
    %573 = vset.pattern.permute.xlu0 3
    %574 = vperm.xlu0 %573, %v36
    %v575 = vpop.permute.xlu0 %574
    %577 = vset.pattern.permute.xlu0 3
    %578 = vperm.xlu0 %577, %v37
    %v579 = vpop.permute.xlu0 %578
    %581 = vset.pattern.permute.xlu0 3
    %582 = vperm.xlu0 %581, %v38
    %v583 = vpop.permute.xlu0 %582
    %585 = vset.pattern.permute.xlu0 3
    %586 = vperm.xlu0 %585, %v39
    %v587 = vpop.permute.xlu0 %586
    %589 = vset.pattern.permute.xlu0 3
    %590 = vperm.xlu0 %589, %v40
    %v591 = vpop.permute.xlu0 %590
    %593 = vset.pattern.permute.xlu0 3
    %594 = vperm.xlu0 %593, %v41
    %v595 = vpop.permute.xlu0 %594
    %597 = vset.pattern.permute.xlu0 3
    %598 = vperm.xlu0 %597, %v42
    %v599 = vpop.permute.xlu0 %598
    %601 = vset.pattern.permute.xlu0 3
    %602 = vperm.xlu0 %601, %v43
    %v603 = vpop.permute.xlu0 %602
    %v605 = vadd.f32 %v557, %v575
    %v606 = vadd.f32 %v558, %v575
    %v607 = vadd.f32 %v559, %v579
    %v608 = vadd.f32 %v560, %v579
    %v609 = vadd.f32 %v561, %v583
    %v610 = vadd.f32 %v562, %v583
    %v611 = vadd.f32 %v563, %v587
    %v612 = vadd.f32 %v564, %v587
    %v613 = vadd.f32 %v565, %v591
    %v614 = vadd.f32 %v566, %v591
    %v615 = vadd.f32 %v567, %v595
    %v616 = vadd.f32 %v568, %v595
    %v617 = vadd.f32 %v569, %v599
    %v618 = vadd.f32 %v570, %v599
    %v619 = vadd.f32 %v571, %v603
    %v620 = vadd.f32 %v572, %v603
    %v621 = vld [vmem:[%s3] sm:$0xff]
    %v622 = vld [vmem:[%s3 + $0x8] sm:$0xff]
    %v623 = vld [vmem:[%s3 + $0x10] sm:$0xff]
    %v624 = vld [vmem:[%s3 + $0x18] sm:$0xff]
    %v625 = vld [vmem:[%s3 + $0x20] sm:$0xff]
    %v626 = vld [vmem:[%s3 + $0x28] sm:$0xff]
    %v627 = vld [vmem:[%s3 + $0x30] sm:$0xff]
    %v628 = vld [vmem:[%s3 + $0x38] sm:$0xff]
    %v629 = vld [vmem:[%s3 + $0x40] sm:$0xff]
    %v630 = vld [vmem:[%s3 + $0x48] sm:$0xff]
    %v631 = vld [vmem:[%s3 + $0x50] sm:$0xff]
    %v632 = vld [vmem:[%s3 + $0x58] sm:$0xff]
    %v633 = vld [vmem:[%s3 + $0x60] sm:$0xff]
    %v634 = vld [vmem:[%s3 + $0x68] sm:$0xff]
    %v635 = vld [vmem:[%s3 + $0x70] sm:$0xff]
    %v636 = vld [vmem:[%s3 + $0x78] sm:$0xff]
    %v637 = vld [vmem:[%s3 + $0x80] sm:$0xff]
    %v638 = vld [vmem:[%s3 + $0x88] sm:$0xff]
    %v639 = vld [vmem:[%s3 + $0x90] sm:$0xff]
    %v640 = vld [vmem:[%s3 + $0x98] sm:$0xff]
    %v641 = vld [vmem:[%s3 + $0xa0] sm:$0xff]
    %v642 = vld [vmem:[%s3 + $0xa8] sm:$0xff]
    %v643 = vld [vmem:[%s3 + $0xb0] sm:$0xff]
    %v644 = vld [vmem:[%s3 + $0xb8] sm:$0xff]
    %v645 = vld [vmem:[%s3 + $0xc0] sm:$0xff]
    %v646 = vld [vmem:[%s3 + $0xc8] sm:$0xff]
    %v647 = vld [vmem:[%s3 + $0xd0] sm:$0xff]
    %v648 = vld [vmem:[%s3 + $0xd8] sm:$0xff]
    %v649 = vld [vmem:[%s3 + $0xe0] sm:$0xff]
    %v650 = vld [vmem:[%s3 + $0xe8] sm:$0xff]
    %v651 = vld [vmem:[%s3 + $0xf0] sm:$0xff]
    %v652 = vld [vmem:[%s3 + $0xf8] sm:$0xff]
    %v653 = vld [vmem:[%s5] sm:$0xff]
    %v654 = vld [vmem:[%s5 + $0x8] sm:$0xff]
    %v655 = vld [vmem:[%s5 + $0x10] sm:$0xff]
    %v656 = vld [vmem:[%s5 + $0x18] sm:$0xff]
    %v657 = vld [vmem:[%s5 + $0x20] sm:$0xff]
    %v658 = vld [vmem:[%s5 + $0x28] sm:$0xff]
    %v659 = vld [vmem:[%s5 + $0x30] sm:$0xff]
    %v660 = vld [vmem:[%s5 + $0x38] sm:$0xff]
    %v661 = vld [vmem:[%s5 + $0x40] sm:$0xff]
    %v662 = vld [vmem:[%s5 + $0x48] sm:$0xff]
    %v663 = vld [vmem:[%s5 + $0x50] sm:$0xff]
    %v664 = vld [vmem:[%s5 + $0x58] sm:$0xff]
    %v665 = vld [vmem:[%s5 + $0x60] sm:$0xff]
    %v666 = vld [vmem:[%s5 + $0x68] sm:$0xff]
    %v667 = vld [vmem:[%s5 + $0x70] sm:$0xff]
    %v668 = vld [vmem:[%s5 + $0x78] sm:$0xff]
    %v669 = vld [vmem:[%s5 + $0x80] sm:$0xff]
    %v670 = vld [vmem:[%s5 + $0x88] sm:$0xff]
    %v671 = vld [vmem:[%s5 + $0x90] sm:$0xff]
    %v672 = vld [vmem:[%s5 + $0x98] sm:$0xff]
    %v673 = vld [vmem:[%s5 + $0xa0] sm:$0xff]
    %v674 = vld [vmem:[%s5 + $0xa8] sm:$0xff]
    %v675 = vld [vmem:[%s5 + $0xb0] sm:$0xff]
    %v676 = vld [vmem:[%s5 + $0xb8] sm:$0xff]
    %v677 = vld [vmem:[%s5 + $0xc0] sm:$0xff]
    %v678 = vld [vmem:[%s5 + $0xc8] sm:$0xff]
    %v679 = vld [vmem:[%s5 + $0xd0] sm:$0xff]
    %v680 = vld [vmem:[%s5 + $0xd8] sm:$0xff]
    %v681 = vld [vmem:[%s5 + $0xe0] sm:$0xff]
    %v682 = vld [vmem:[%s5 + $0xe8] sm:$0xff]
    %v683 = vld [vmem:[%s5 + $0xf0] sm:$0xff]
    %v684 = vld [vmem:[%s5 + $0xf8] sm:$0xff]
    %686 = vset.pattern.permute.xlu0 4
    %687 = vperm.xlu0 %686, %v653
    %v688 = vpop.permute.xlu0 %687
    %691 = vset.pattern.permute.xlu0 4
    %692 = vperm.xlu0 %691, %v654
    %v693 = vpop.permute.xlu0 %692
    %696 = vset.pattern.permute.xlu0 4
    %697 = vperm.xlu0 %696, %v655
    %v698 = vpop.permute.xlu0 %697
    %701 = vset.pattern.permute.xlu0 4
    %702 = vperm.xlu0 %701, %v656
    %v703 = vpop.permute.xlu0 %702
    %706 = vset.pattern.permute.xlu0 4
    %707 = vperm.xlu0 %706, %v657
    %v708 = vpop.permute.xlu0 %707
    %711 = vset.pattern.permute.xlu0 4
    %712 = vperm.xlu0 %711, %v658
    %v713 = vpop.permute.xlu0 %712
    %716 = vset.pattern.permute.xlu0 4
    %717 = vperm.xlu0 %716, %v659
    %v718 = vpop.permute.xlu0 %717
    %721 = vset.pattern.permute.xlu0 4
    %722 = vperm.xlu0 %721, %v660
    %v723 = vpop.permute.xlu0 %722
    %726 = vset.pattern.permute.xlu0 4
    %727 = vperm.xlu0 %726, %v661
    %v728 = vpop.permute.xlu0 %727
    %731 = vset.pattern.permute.xlu0 4
    %732 = vperm.xlu0 %731, %v662
    %v733 = vpop.permute.xlu0 %732
    %736 = vset.pattern.permute.xlu0 4
    %737 = vperm.xlu0 %736, %v663
    %v738 = vpop.permute.xlu0 %737
    %741 = vset.pattern.permute.xlu0 4
    %742 = vperm.xlu0 %741, %v664
    %v743 = vpop.permute.xlu0 %742
    %746 = vset.pattern.permute.xlu0 4
    %747 = vperm.xlu0 %746, %v665
    %v748 = vpop.permute.xlu0 %747
    %751 = vset.pattern.permute.xlu0 4
    %752 = vperm.xlu0 %751, %v666
    %v753 = vpop.permute.xlu0 %752
    %756 = vset.pattern.permute.xlu0 4
    %757 = vperm.xlu0 %756, %v667
    %v758 = vpop.permute.xlu0 %757
    %761 = vset.pattern.permute.xlu0 4
    %762 = vperm.xlu0 %761, %v668
    %v763 = vpop.permute.xlu0 %762
    %766 = vset.pattern.permute.xlu0 4
    %767 = vperm.xlu0 %766, %v669
    %v768 = vpop.permute.xlu0 %767
    %771 = vset.pattern.permute.xlu0 4
    %772 = vperm.xlu0 %771, %v670
    %v773 = vpop.permute.xlu0 %772
    %776 = vset.pattern.permute.xlu0 4
    %777 = vperm.xlu0 %776, %v671
    %v778 = vpop.permute.xlu0 %777
    %781 = vset.pattern.permute.xlu0 4
    %782 = vperm.xlu0 %781, %v672
    %v783 = vpop.permute.xlu0 %782
    %786 = vset.pattern.permute.xlu0 4
    %787 = vperm.xlu0 %786, %v673
    %v788 = vpop.permute.xlu0 %787
    %791 = vset.pattern.permute.xlu0 4
    %792 = vperm.xlu0 %791, %v674
    %v793 = vpop.permute.xlu0 %792
    %796 = vset.pattern.permute.xlu0 4
    %797 = vperm.xlu0 %796, %v675
    %v798 = vpop.permute.xlu0 %797
    %801 = vset.pattern.permute.xlu0 4
    %802 = vperm.xlu0 %801, %v676
    %v803 = vpop.permute.xlu0 %802
    %806 = vset.pattern.permute.xlu0 4
    %807 = vperm.xlu0 %806, %v677
    %v808 = vpop.permute.xlu0 %807
    %811 = vset.pattern.permute.xlu0 4
    %812 = vperm.xlu0 %811, %v678
    %v813 = vpop.permute.xlu0 %812
    %816 = vset.pattern.permute.xlu0 4
    %817 = vperm.xlu0 %816, %v679
    %v818 = vpop.permute.xlu0 %817
    %821 = vset.pattern.permute.xlu0 4
    %822 = vperm.xlu0 %821, %v680
    %v823 = vpop.permute.xlu0 %822
    %826 = vset.pattern.permute.xlu0 4
    %827 = vperm.xlu0 %826, %v681
    %v828 = vpop.permute.xlu0 %827
    %831 = vset.pattern.permute.xlu0 4
    %832 = vperm.xlu0 %831, %v682
    %v833 = vpop.permute.xlu0 %832
    %836 = vset.pattern.permute.xlu0 4
    %837 = vperm.xlu0 %836, %v683
    %v838 = vpop.permute.xlu0 %837
    %841 = vset.pattern.permute.xlu0 4
    %842 = vperm.xlu0 %841, %v684
    %v843 = vpop.permute.xlu0 %842
    %v846 = vsel %vm262, %v621, 0
    %v849 = vsel %vm262, %v622, 0
    %v852 = vsel %vm262, %v623, 0
    %v855 = vsel %vm262, %v624, 0
    %v858 = vsel %vm262, %v625, 0
    %v861 = vsel %vm262, %v626, 0
    %v864 = vsel %vm262, %v627, 0
    %v867 = vsel %vm262, %v628, 0
    %v870 = vsel %vm262, %v629, 0
    %v873 = vsel %vm262, %v630, 0
    %v876 = vsel %vm262, %v631, 0
    %v879 = vsel %vm262, %v632, 0
    %v882 = vsel %vm262, %v633, 0
    %v885 = vsel %vm262, %v634, 0
    %v888 = vsel %vm262, %v635, 0
    %v891 = vsel %vm262, %v636, 0
    %v894 = vsel %vm262, %v637, 0
    %v897 = vsel %vm262, %v638, 0
    %v900 = vsel %vm262, %v639, 0
    %v903 = vsel %vm262, %v640, 0
    %v906 = vsel %vm262, %v641, 0
    %v909 = vsel %vm262, %v642, 0
    %v912 = vsel %vm262, %v643, 0
    %v915 = vsel %vm262, %v644, 0
    %v918 = vsel %vm262, %v645, 0
    %v921 = vsel %vm262, %v646, 0
    %v924 = vsel %vm262, %v647, 0
    %v927 = vsel %vm262, %v648, 0
    %v930 = vsel %vm262, %v649, 0
    %v933 = vsel %vm262, %v650, 0
    %v936 = vsel %vm262, %v651, 0
    %v939 = vsel %vm262, %v652, 0
    %941 = vmatprep.subr.mxu0 %v606
    %942 = vmatpush1.msra.mxu0 %v605
    %943 = vmatprep.subr.mxu0 %v608
    %944 = vmatpush1.msra.mxu0 %v607
    %945 = vmatprep.subr.mxu0 %v610
    %946 = vmatpush1.msra.mxu0 %v609
    %947 = vmatprep.subr.mxu0 %v612
    %948 = vmatpush1.msra.mxu0 %v611
    %949 = vmatprep.subr.mxu0 %v614
    %950 = vmatpush1.msra.mxu0 %v613
    %951 = vmatprep.subr.mxu0 %v616
    %952 = vmatpush1.msra.mxu0 %v615
    %953 = vmatprep.subr.mxu0 %v618
    %954 = vmatpush1.msra.mxu0 %v617
    %955 = vmatprep.subr.mxu0 %v620
    %956 = vmatpush1.msra.mxu0 %v619
    %957 = vmatprep.subr.mxu0 0.0
    %958 = vmatpush1.msra.mxu0 0.0
    %959 = vmatprep.subr.mxu0 0.0
    %960 = vmatpush1.msra.mxu0 0.0
    %961 = vmatprep.subr.mxu0 0.0
    %962 = vmatpush1.msra.mxu0 0.0
    %963 = vmatprep.subr.mxu0 0.0
    %964 = vmatpush1.msra.mxu0 0.0
    %965 = vmatprep.subr.mxu0 0.0
    %966 = vmatpush1.msra.mxu0 0.0
    %967 = vmatprep.subr.mxu0 0.0
    %968 = vmatpush1.msra.mxu0 0.0
    %969 = vmatprep.subr.mxu0 0.0
    %970 = vmatpush1.msra.mxu0 0.0
    %971 = vmatprep.subr.mxu0 0.0
    %972 = vmatpush1.msra.mxu0 0.0
    %973 = vmatprep.subr.mxu0 0.0
    %974 = vmatpush1.msra.mxu0 0.0
    %975 = vmatprep.subr.mxu0 0.0
    %976 = vmatpush1.msra.mxu0 0.0
    %977 = vmatprep.subr.mxu0 0.0
    %978 = vmatpush1.msra.mxu0 0.0
    %979 = vmatprep.subr.mxu0 0.0
    %980 = vmatpush1.msra.mxu0 0.0
    %981 = vmatprep.subr.mxu0 0.0
    %982 = vmatpush1.msra.mxu0 0.0
    %983 = vmatprep.subr.mxu0 0.0
    %984 = vmatpush1.msra.mxu0 0.0
    %985 = vmatprep.subr.mxu0 0.0
    %986 = vmatpush1.msra.mxu0 0.0
    %987 = vmatprep.subr.mxu0 0.0
    %988 = vmatpush1.msra.mxu0 0.0
    %989 = vmatprep.subr.mxu0 0.0
    %990 = vmatpush1.msra.mxu0 0.0
    %991 = vmatprep.subr.mxu0 0.0
    %992 = vmatpush1.msra.mxu0 0.0
    %993 = vmatprep.subr.mxu0 0.0
    %994 = vmatpush1.msra.mxu0 0.0
    %995 = vmatprep.subr.mxu0 0.0
    %996 = vmatpush1.msra.mxu0 0.0
    %997 = vmatprep.subr.mxu0 0.0
    %998 = vmatpush1.msra.mxu0 0.0
    %999 = vmatprep.subr.mxu0 0.0
    %1000 = vmatpush1.msra.mxu0 0.0
    %1001 = vmatprep.subr.mxu0 0.0
    %1002 = vmatpush1.msra.mxu0 0.0
    %1003 = vmatprep.subr.mxu0 0.0
    %1004 = vmatpush1.msra.mxu0 0.0
    %1005 = vmatprep.mubr.f32.mxu0 0.0
    %1006 = vmatmul.mubr.f32.gmra.mrb[0].mxu0 %v846
    %v1007 = vpop.f32.mrb[0].mxu0
    %v1008 = vadd.f32 %v688, %v1007
    %v1009 = vpop.f32.mrb[0].mxu0
    %v1010 = vadd.f32 %v688, %v1009
    %1011 = vmatprep.mubr.f32.mxu0 0.0
    %1012 = vmatmul.mubr.f32.gmra.mrb[0].mxu0 %v849
    %v1013 = vpop.f32.mrb[0].mxu0
    %v1014 = vadd.f32 %v693, %v1013
    %v1015 = vpop.f32.mrb[0].mxu0
    %v1016 = vadd.f32 %v693, %v1015
    %1017 = vmatprep.mubr.f32.mxu0 0.0
    %1018 = vmatmul.mubr.f32.gmra.mrb[0].mxu0 %v852
    %v1019 = vpop.f32.mrb[0].mxu0
    %v1020 = vadd.f32 %v698, %v1019
    %v1021 = vpop.f32.mrb[0].mxu0
    %v1022 = vadd.f32 %v698, %v1021
    %1023 = vmatprep.mubr.f32.mxu0 0.0
    %1024 = vmatmul.mubr.f32.gmra.mrb[0].mxu0 %v855
    %v1025 = vpop.f32.mrb[0].mxu0
    %v1026 = vadd.f32 %v703, %v1025
    %v1027 = vpop.f32.mrb[0].mxu0
    %v1028 = vadd.f32 %v703, %v1027
    %1029 = vmatprep.mubr.f32.mxu0 0.0
    %1030 = vmatmul.mubr.f32.gmra.mrb[0].mxu0 %v858
    %v1031 = vpop.f32.mrb[0].mxu0
    %v1032 = vadd.f32 %v708, %v1031
    %v1033 = vpop.f32.mrb[0].mxu0
    %v1034 = vadd.f32 %v708, %v1033
    %1035 = vmatprep.mubr.f32.mxu0 0.0
    %1036 = vmatmul.mubr.f32.gmra.mrb[0].mxu0 %v861
    %v1037 = vpop.f32.mrb[0].mxu0
    %v1038 = vadd.f32 %v713, %v1037
    %v1039 = vpop.f32.mrb[0].mxu0
    %v1040 = vadd.f32 %v713, %v1039
    %1041 = vmatprep.mubr.f32.mxu0 0.0
    %1042 = vmatmul.mubr.f32.gmra.mrb[0].mxu0 %v864
    %v1043 = vpop.f32.mrb[0].mxu0
    %v1044 = vadd.f32 %v718, %v1043
    %v1045 = vpop.f32.mrb[0].mxu0
    %v1046 = vadd.f32 %v718, %v1045
    %1047 = vmatprep.mubr.f32.mxu0 0.0
    %1048 = vmatmul.mubr.f32.gmra.mrb[0].mxu0 %v867
    %v1049 = vpop.f32.mrb[0].mxu0
    %v1050 = vadd.f32 %v723, %v1049
    %v1051 = vpop.f32.mrb[0].mxu0
    %v1052 = vadd.f32 %v723, %v1051
    %1053 = vmatprep.mubr.f32.mxu0 0.0
    %1054 = vmatmul.mubr.f32.gmra.mrb[0].mxu0 %v870
    %v1055 = vpop.f32.mrb[0].mxu0
    %v1056 = vadd.f32 %v728, %v1055
    %v1057 = vpop.f32.mrb[0].mxu0
    %v1058 = vadd.f32 %v728, %v1057
    %1059 = vmatprep.mubr.f32.mxu0 0.0
    %1060 = vmatmul.mubr.f32.gmra.mrb[0].mxu0 %v873
    %v1061 = vpop.f32.mrb[0].mxu0
    %v1062 = vadd.f32 %v733, %v1061
    %v1063 = vpop.f32.mrb[0].mxu0
    %v1064 = vadd.f32 %v733, %v1063
    %1065 = vmatprep.mubr.f32.mxu0 0.0
    %1066 = vmatmul.mubr.f32.gmra.mrb[0].mxu0 %v876
    %v1067 = vpop.f32.mrb[0].mxu0
    %v1068 = vadd.f32 %v738, %v1067
    %v1069 = vpop.f32.mrb[0].mxu0
    %v1070 = vadd.f32 %v738, %v1069
    %1071 = vmatprep.mubr.f32.mxu0 0.0
    %1072 = vmatmul.mubr.f32.gmra.mrb[0].mxu0 %v879
    %v1073 = vpop.f32.mrb[0].mxu0
    %v1074 = vadd.f32 %v743, %v1073
    %v1075 = vpop.f32.mrb[0].mxu0
    %v1076 = vadd.f32 %v743, %v1075
    %1077 = vmatprep.mubr.f32.mxu0 0.0
    %1078 = vmatmul.mubr.f32.gmra.mrb[0].mxu0 %v882
    %v1079 = vpop.f32.mrb[0].mxu0
    %v1080 = vadd.f32 %v748, %v1079
    %v1081 = vpop.f32.mrb[0].mxu0
    %v1082 = vadd.f32 %v748, %v1081
    %1083 = vmatprep.mubr.f32.mxu0 0.0
    %1084 = vmatmul.mubr.f32.gmra.mrb[0].mxu0 %v885
    %v1085 = vpop.f32.mrb[0].mxu0
    %v1086 = vadd.f32 %v753, %v1085
    %v1087 = vpop.f32.mrb[0].mxu0
    %v1088 = vadd.f32 %v753, %v1087
    %1089 = vmatprep.mubr.f32.mxu0 0.0
    %1090 = vmatmul.mubr.f32.gmra.mrb[0].mxu0 %v888
    %v1091 = vpop.f32.mrb[0].mxu0
    %v1092 = vadd.f32 %v758, %v1091
    %v1093 = vpop.f32.mrb[0].mxu0
    %v1094 = vadd.f32 %v758, %v1093
    %1095 = vmatprep.mubr.f32.mxu0 0.0
    %1096 = vmatmul.mubr.f32.gmra.mrb[0].mxu0 %v891
    %v1097 = vpop.f32.mrb[0].mxu0
    %v1098 = vadd.f32 %v763, %v1097
    %v1099 = vpop.f32.mrb[0].mxu0
    %v1100 = vadd.f32 %v763, %v1099
    %1101 = vmatprep.mubr.f32.mxu0 0.0
    %1102 = vmatmul.mubr.f32.gmra.mrb[0].mxu0 %v894
    %v1103 = vpop.f32.mrb[0].mxu0
    %v1104 = vadd.f32 %v768, %v1103
    %v1105 = vpop.f32.mrb[0].mxu0
    %v1106 = vadd.f32 %v768, %v1105
    %1107 = vmatprep.mubr.f32.mxu0 0.0
    %1108 = vmatmul.mubr.f32.gmra.mrb[0].mxu0 %v897
    %v1109 = vpop.f32.mrb[0].mxu0
    %v1110 = vadd.f32 %v773, %v1109
    %v1111 = vpop.f32.mrb[0].mxu0
    %v1112 = vadd.f32 %v773, %v1111
    %1113 = vmatprep.mubr.f32.mxu0 0.0
    %1114 = vmatmul.mubr.f32.gmra.mrb[0].mxu0 %v900
    %v1115 = vpop.f32.mrb[0].mxu0
    %v1116 = vadd.f32 %v778, %v1115
    %v1117 = vpop.f32.mrb[0].mxu0
    %v1118 = vadd.f32 %v778, %v1117
    %1119 = vmatprep.mubr.f32.mxu0 0.0
    %1120 = vmatmul.mubr.f32.gmra.mrb[0].mxu0 %v903
    %v1121 = vpop.f32.mrb[0].mxu0
    %v1122 = vadd.f32 %v783, %v1121
    %v1123 = vpop.f32.mrb[0].mxu0
    %v1124 = vadd.f32 %v783, %v1123
    %1125 = vmatprep.mubr.f32.mxu0 0.0
    %1126 = vmatmul.mubr.f32.gmra.mrb[0].mxu0 %v906
    %v1127 = vpop.f32.mrb[0].mxu0
    %v1128 = vadd.f32 %v788, %v1127
    %v1129 = vpop.f32.mrb[0].mxu0
    %v1130 = vadd.f32 %v788, %v1129
    %1131 = vmatprep.mubr.f32.mxu0 0.0
    %1132 = vmatmul.mubr.f32.gmra.mrb[0].mxu0 %v909
    %v1133 = vpop.f32.mrb[0].mxu0
    %v1134 = vadd.f32 %v793, %v1133
    %v1135 = vpop.f32.mrb[0].mxu0
    %v1136 = vadd.f32 %v793, %v1135
    %1137 = vmatprep.mubr.f32.mxu0 0.0
    %1138 = vmatmul.mubr.f32.gmra.mrb[0].mxu0 %v912
    %v1139 = vpop.f32.mrb[0].mxu0
    %v1140 = vadd.f32 %v798, %v1139
    %v1141 = vpop.f32.mrb[0].mxu0
    %v1142 = vadd.f32 %v798, %v1141
    %1143 = vmatprep.mubr.f32.mxu0 0.0
    %1144 = vmatmul.mubr.f32.gmra.mrb[0].mxu0 %v915
    %v1145 = vpop.f32.mrb[0].mxu0
    %v1146 = vadd.f32 %v803, %v1145
    %v1147 = vpop.f32.mrb[0].mxu0
    %v1148 = vadd.f32 %v803, %v1147
    %1149 = vmatprep.mubr.f32.mxu0 0.0
    %1150 = vmatmul.mubr.f32.gmra.mrb[0].mxu0 %v918
    %v1151 = vpop.f32.mrb[0].mxu0
    %v1152 = vadd.f32 %v808, %v1151
    %v1153 = vpop.f32.mrb[0].mxu0
    %v1154 = vadd.f32 %v808, %v1153
    %1155 = vmatprep.mubr.f32.mxu0 0.0
    %1156 = vmatmul.mubr.f32.gmra.mrb[0].mxu0 %v921
    %v1157 = vpop.f32.mrb[0].mxu0
    %v1158 = vadd.f32 %v813, %v1157
    %v1159 = vpop.f32.mrb[0].mxu0
    %v1160 = vadd.f32 %v813, %v1159
    %1161 = vmatprep.mubr.f32.mxu0 0.0
    %1162 = vmatmul.mubr.f32.gmra.mrb[0].mxu0 %v924
    %v1163 = vpop.f32.mrb[0].mxu0
    %v1164 = vadd.f32 %v818, %v1163
    %v1165 = vpop.f32.mrb[0].mxu0
    %v1166 = vadd.f32 %v818, %v1165
    %1167 = vmatprep.mubr.f32.mxu0 0.0
    %1168 = vmatmul.mubr.f32.gmra.mrb[0].mxu0 %v927
    %v1169 = vpop.f32.mrb[0].mxu0
    %v1170 = vadd.f32 %v823, %v1169
    %v1171 = vpop.f32.mrb[0].mxu0
    %v1172 = vadd.f32 %v823, %v1171
    %1173 = vmatprep.mubr.f32.mxu0 0.0
    %1174 = vmatmul.mubr.f32.gmra.mrb[0].mxu0 %v930
    %v1175 = vpop.f32.mrb[0].mxu0
    %v1176 = vadd.f32 %v828, %v1175
    %v1177 = vpop.f32.mrb[0].mxu0
    %v1178 = vadd.f32 %v828, %v1177
    %1179 = vmatprep.mubr.f32.mxu0 0.0
    %1180 = vmatmul.mubr.f32.gmra.mrb[0].mxu0 %v933
    %v1181 = vpop.f32.mrb[0].mxu0
    %v1182 = vadd.f32 %v833, %v1181
    %v1183 = vpop.f32.mrb[0].mxu0
    %v1184 = vadd.f32 %v833, %v1183
    %1185 = vmatprep.mubr.f32.mxu0 0.0
    %1186 = vmatmul.mubr.f32.gmra.mrb[0].mxu0 %v936
    %v1187 = vpop.f32.mrb[0].mxu0
    %v1188 = vadd.f32 %v838, %v1187
    %v1189 = vpop.f32.mrb[0].mxu0
    %v1190 = vadd.f32 %v838, %v1189
    %1191 = vmatprep.mubr.f32.mxu0 0.0
    %1192 = vmatmul.mubr.f32.gmra.mrb[0].mxu0 %v939
    %v1193 = vpop.f32.mrb[0].mxu0
    %v1194 = vadd.f32 %v843, %v1193
    %v1195 = vpop.f32.mrb[0].mxu0
    %v1196 = vadd.f32 %v843, %v1195
    %1197 = vdwg.mxu0
    %v1198 = vmax.f32 %v1008, 0.0
    %v1199 = vmax.f32 %v1010, 0.0
    %v1200 = vmax.f32 %v1014, 0.0
    %v1201 = vmax.f32 %v1016, 0.0
    %v1202 = vmax.f32 %v1020, 0.0
    %v1203 = vmax.f32 %v1022, 0.0
    %v1204 = vmax.f32 %v1026, 0.0
    %v1205 = vmax.f32 %v1028, 0.0
    %v1206 = vmax.f32 %v1032, 0.0
    %v1207 = vmax.f32 %v1034, 0.0
    %v1208 = vmax.f32 %v1038, 0.0
    %v1209 = vmax.f32 %v1040, 0.0
    %v1210 = vmax.f32 %v1044, 0.0
    %v1211 = vmax.f32 %v1046, 0.0
    %v1212 = vmax.f32 %v1050, 0.0
    %v1213 = vmax.f32 %v1052, 0.0
    %v1214 = vmax.f32 %v1056, 0.0
    %v1215 = vmax.f32 %v1058, 0.0
    %v1216 = vmax.f32 %v1062, 0.0
    %v1217 = vmax.f32 %v1064, 0.0
    %v1218 = vmax.f32 %v1068, 0.0
    %v1219 = vmax.f32 %v1070, 0.0
    %v1220 = vmax.f32 %v1074, 0.0
    %v1221 = vmax.f32 %v1076, 0.0
    %v1222 = vmax.f32 %v1080, 0.0
    %v1223 = vmax.f32 %v1082, 0.0
    %v1224 = vmax.f32 %v1086, 0.0
    %v1225 = vmax.f32 %v1088, 0.0
    %v1226 = vmax.f32 %v1092, 0.0
    %v1227 = vmax.f32 %v1094, 0.0
    %v1228 = vmax.f32 %v1098, 0.0
    %v1229 = vmax.f32 %v1100, 0.0
    %v1230 = vmax.f32 %v1104, 0.0
    %v1231 = vmax.f32 %v1106, 0.0
    %v1232 = vmax.f32 %v1110, 0.0
    %v1233 = vmax.f32 %v1112, 0.0
    %v1234 = vmax.f32 %v1116, 0.0
    %v1235 = vmax.f32 %v1118, 0.0
    %v1236 = vmax.f32 %v1122, 0.0
    %v1237 = vmax.f32 %v1124, 0.0
    %v1238 = vmax.f32 %v1128, 0.0
    %v1239 = vmax.f32 %v1130, 0.0
    %v1240 = vmax.f32 %v1134, 0.0
    %v1241 = vmax.f32 %v1136, 0.0
    %v1242 = vmax.f32 %v1140, 0.0
    %v1243 = vmax.f32 %v1142, 0.0
    %v1244 = vmax.f32 %v1146, 0.0
    %v1245 = vmax.f32 %v1148, 0.0
    %v1246 = vmax.f32 %v1152, 0.0
    %v1247 = vmax.f32 %v1154, 0.0
    %v1248 = vmax.f32 %v1158, 0.0
    %v1249 = vmax.f32 %v1160, 0.0
    %v1250 = vmax.f32 %v1164, 0.0
    %v1251 = vmax.f32 %v1166, 0.0
    %v1252 = vmax.f32 %v1170, 0.0
    %v1253 = vmax.f32 %v1172, 0.0
    %v1254 = vmax.f32 %v1176, 0.0
    %v1255 = vmax.f32 %v1178, 0.0
    %v1256 = vmax.f32 %v1182, 0.0
    %v1257 = vmax.f32 %v1184, 0.0
    %v1258 = vmax.f32 %v1188, 0.0
    %v1259 = vmax.f32 %v1190, 0.0
    %v1260 = vmax.f32 %v1194, 0.0
    %v1261 = vmax.f32 %v1196, 0.0
    %v1262 = vld [vmem:[%s4] sm:$0xff]
    %v1263 = vld [vmem:[%s4 + $0x8] sm:$0xff]
    %v1264 = vld [vmem:[%s4 + $0x10] sm:$0xff]
    %v1265 = vld [vmem:[%s4 + $0x18] sm:$0xff]
    %v1266 = vld [vmem:[%s4 + $0x20] sm:$0xff]
    %v1267 = vld [vmem:[%s4 + $0x28] sm:$0xff]
    %v1268 = vld [vmem:[%s4 + $0x30] sm:$0xff]
    %v1269 = vld [vmem:[%s4 + $0x38] sm:$0xff]
    %v1270 = vld [vmem:[%s4 + $0x40] sm:$0xff]
    %v1271 = vld [vmem:[%s4 + $0x48] sm:$0xff]
    %v1272 = vld [vmem:[%s4 + $0x50] sm:$0xff]
    %v1273 = vld [vmem:[%s4 + $0x58] sm:$0xff]
    %v1274 = vld [vmem:[%s4 + $0x60] sm:$0xff]
    %v1275 = vld [vmem:[%s4 + $0x68] sm:$0xff]
    %v1276 = vld [vmem:[%s4 + $0x70] sm:$0xff]
    %v1277 = vld [vmem:[%s4 + $0x78] sm:$0xff]
    %1278 = vset.pattern.permute.xlu0 5
    %1279 = vperm.xlu0 %1278, %v36
    %v1280 = vpop.permute.xlu0 %1279
    %1282 = vset.pattern.permute.xlu0 5
    %1283 = vperm.xlu0 %1282, %v37
    %v1284 = vpop.permute.xlu0 %1283
    %1286 = vset.pattern.permute.xlu0 5
    %1287 = vperm.xlu0 %1286, %v38
    %v1288 = vpop.permute.xlu0 %1287
    %1290 = vset.pattern.permute.xlu0 5
    %1291 = vperm.xlu0 %1290, %v39
    %v1292 = vpop.permute.xlu0 %1291
    %1294 = vset.pattern.permute.xlu0 5
    %1295 = vperm.xlu0 %1294, %v40
    %v1296 = vpop.permute.xlu0 %1295
    %1298 = vset.pattern.permute.xlu0 5
    %1299 = vperm.xlu0 %1298, %v41
    %v1300 = vpop.permute.xlu0 %1299
    %1302 = vset.pattern.permute.xlu0 5
    %1303 = vperm.xlu0 %1302, %v42
    %v1304 = vpop.permute.xlu0 %1303
    %1306 = vset.pattern.permute.xlu0 5
    %1307 = vperm.xlu0 %1306, %v43
    %v1308 = vpop.permute.xlu0 %1307
    %1310 = vmatprep.subr.mxu0 %v1199
    %1311 = vmatpush1.msra.mxu0 %v1198
    %1312 = vmatprep.subr.mxu0 %v1201
    %1313 = vmatpush1.msra.mxu0 %v1200
    %1314 = vmatprep.subr.mxu0 %v1203
    %1315 = vmatpush1.msra.mxu0 %v1202
    %1316 = vmatprep.subr.mxu0 %v1205
    %1317 = vmatpush1.msra.mxu0 %v1204
    %1318 = vmatprep.subr.mxu0 %v1207
    %1319 = vmatpush1.msra.mxu0 %v1206
    %1320 = vmatprep.subr.mxu0 %v1209
    %1321 = vmatpush1.msra.mxu0 %v1208
    %1322 = vmatprep.subr.mxu0 %v1211
    %1323 = vmatpush1.msra.mxu0 %v1210
    %1324 = vmatprep.subr.mxu0 %v1213
    %1325 = vmatpush1.msra.mxu0 %v1212
    %1326 = vmatprep.subr.mxu0 %v1215
    %1327 = vmatpush1.msra.mxu0 %v1214
    %1328 = vmatprep.subr.mxu0 %v1217
    %1329 = vmatpush1.msra.mxu0 %v1216
    %1330 = vmatprep.subr.mxu0 %v1219
    %1331 = vmatpush1.msra.mxu0 %v1218
    %1332 = vmatprep.subr.mxu0 %v1221
    %1333 = vmatpush1.msra.mxu0 %v1220
    %1334 = vmatprep.subr.mxu0 %v1223
    %1335 = vmatpush1.msra.mxu0 %v1222
    %1336 = vmatprep.subr.mxu0 %v1225
    %1337 = vmatpush1.msra.mxu0 %v1224
    %1338 = vmatprep.subr.mxu0 %v1227
    %1339 = vmatpush1.msra.mxu0 %v1226
    %1340 = vmatprep.subr.mxu0 %v1229
    %1341 = vmatpush1.msra.mxu0 %v1228
    %1342 = vmatprep.subr.mxu0 %v1231
    %1343 = vmatpush1.msra.mxu0 %v1230
    %1344 = vmatprep.subr.mxu0 %v1233
    %1345 = vmatpush1.msra.mxu0 %v1232
    %1346 = vmatprep.subr.mxu0 %v1235
    %1347 = vmatpush1.msra.mxu0 %v1234
    %1348 = vmatprep.subr.mxu0 %v1237
    %1349 = vmatpush1.msra.mxu0 %v1236
    %1350 = vmatprep.subr.mxu0 %v1239
    %1351 = vmatpush1.msra.mxu0 %v1238
    %1352 = vmatprep.subr.mxu0 %v1241
    %1353 = vmatpush1.msra.mxu0 %v1240
    %1354 = vmatprep.subr.mxu0 %v1243
    %1355 = vmatpush1.msra.mxu0 %v1242
    %1356 = vmatprep.subr.mxu0 %v1245
    %1357 = vmatpush1.msra.mxu0 %v1244
    %1358 = vmatprep.subr.mxu0 %v1247
    %1359 = vmatpush1.msra.mxu0 %v1246
    %1360 = vmatprep.subr.mxu0 %v1249
    %1361 = vmatpush1.msra.mxu0 %v1248
    %1362 = vmatprep.subr.mxu0 %v1251
    %1363 = vmatpush1.msra.mxu0 %v1250
    %1364 = vmatprep.subr.mxu0 %v1253
    %1365 = vmatpush1.msra.mxu0 %v1252
    %1366 = vmatprep.subr.mxu0 %v1255
    %1367 = vmatpush1.msra.mxu0 %v1254
    %1368 = vmatprep.subr.mxu0 %v1257
    %1369 = vmatpush1.msra.mxu0 %v1256
    %1370 = vmatprep.subr.mxu0 %v1259
    %1371 = vmatpush1.msra.mxu0 %v1258
    %1372 = vmatprep.subr.mxu0 %v1261
    %1373 = vmatpush1.msra.mxu0 %v1260
    %1374 = vmatprep.mubr.f32.mxu0 %v1263
    %1375 = vmatmul.mubr.f32.gmra.mrb[0].mxu0 %v1262
    %v1376 = vpop.f32.mrb[0].mxu0
    %v1377 = vadd.f32 %v1280, %v1376
    %v1378 = vpop.f32.mrb[0].mxu0
    %v1379 = vadd.f32 %v1280, %v1378
    %1380 = vmatprep.mubr.f32.mxu0 %v1265
    %1381 = vmatmul.mubr.f32.gmra.mrb[0].mxu0 %v1264
    %v1382 = vpop.f32.mrb[0].mxu0
    %v1383 = vadd.f32 %v1284, %v1382
    %v1384 = vpop.f32.mrb[0].mxu0
    %v1385 = vadd.f32 %v1284, %v1384
    %1386 = vmatprep.mubr.f32.mxu0 %v1267
    %1387 = vmatmul.mubr.f32.gmra.mrb[0].mxu0 %v1266
    %v1388 = vpop.f32.mrb[0].mxu0
    %v1389 = vadd.f32 %v1288, %v1388
    %v1390 = vpop.f32.mrb[0].mxu0
    %v1391 = vadd.f32 %v1288, %v1390
    %1392 = vmatprep.mubr.f32.mxu0 %v1269
    %1393 = vmatmul.mubr.f32.gmra.mrb[0].mxu0 %v1268
    %v1394 = vpop.f32.mrb[0].mxu0
    %v1395 = vadd.f32 %v1292, %v1394
    %v1396 = vpop.f32.mrb[0].mxu0
    %v1397 = vadd.f32 %v1292, %v1396
    %1398 = vmatprep.mubr.f32.mxu0 %v1271
    %1399 = vmatmul.mubr.f32.gmra.mrb[0].mxu0 %v1270
    %v1400 = vpop.f32.mrb[0].mxu0
    %v1401 = vadd.f32 %v1296, %v1400
    %v1402 = vpop.f32.mrb[0].mxu0
    %v1403 = vadd.f32 %v1296, %v1402
    %1404 = vmatprep.mubr.f32.mxu0 %v1273
    %1405 = vmatmul.mubr.f32.gmra.mrb[0].mxu0 %v1272
    %v1406 = vpop.f32.mrb[0].mxu0
    %v1407 = vadd.f32 %v1300, %v1406
    %v1408 = vpop.f32.mrb[0].mxu0
    %v1409 = vadd.f32 %v1300, %v1408
    %1410 = vmatprep.mubr.f32.mxu0 %v1275
    %1411 = vmatmul.mubr.f32.gmra.mrb[0].mxu0 %v1274
    %v1412 = vpop.f32.mrb[0].mxu0
    %v1413 = vadd.f32 %v1304, %v1412
    %v1414 = vpop.f32.mrb[0].mxu0
    %v1415 = vadd.f32 %v1304, %v1414
    %1416 = vmatprep.mubr.f32.mxu0 %v1277
    %1417 = vmatmul.mubr.f32.gmra.mrb[0].mxu0 %v1276
    %v1418 = vpop.f32.mrb[0].mxu0
    %v1419 = vadd.f32 %v1308, %v1418
    %v1420 = vpop.f32.mrb[0].mxu0
    %v1421 = vadd.f32 %v1308, %v1420
    %1422 = vdwg.mxu0
    %v1423 = vadd.f32 %v605, %v1377
    %v1424 = vadd.f32 %v606, %v1379
    %v1425 = vadd.f32 %v607, %v1383
    %v1426 = vadd.f32 %v608, %v1385
    %v1427 = vadd.f32 %v609, %v1389
    %v1428 = vadd.f32 %v610, %v1391
    %v1429 = vadd.f32 %v611, %v1395
    %v1430 = vadd.f32 %v612, %v1397
    %v1431 = vadd.f32 %v613, %v1401
    %v1432 = vadd.f32 %v614, %v1403
    %v1433 = vadd.f32 %v615, %v1407
    %v1434 = vadd.f32 %v616, %v1409
    %v1435 = vadd.f32 %v617, %v1413
    %v1436 = vadd.f32 %v618, %v1415
    %v1437 = vadd.f32 %v619, %v1419
    %v1438 = vadd.f32 %v620, %v1421
    %v1439 = vadd.f32 %v1423, %v1425
    %v1440 = vadd.f32 %v1439, %v1427
    %v1441 = vadd.f32 %v1440, %v1429
    %v1442 = vadd.f32 %v1441, %v1431
    %v1443 = vadd.f32 %v1442, %v1433
    %v1444 = vadd.f32 %v1443, %v1435
    %v1445 = vadd.f32 %v1444, %v1437
    %v1446 = vrot.slane %v1445, 4
    %v1447 = vadd.f32 %v1445, %v1446
    %v1448 = vrot.slane %v1447, 2
    %v1449 = vadd.f32 %v1447, %v1448
    %v1450 = vrot.slane %v1449, 1
    %v1451 = vadd.f32 %v1449, %v1450
    %v1452 = vadd.f32 %v1424, %v1426
    %v1453 = vadd.f32 %v1452, %v1428
    %v1454 = vadd.f32 %v1453, %v1430
    %v1455 = vadd.f32 %v1454, %v1432
    %v1456 = vadd.f32 %v1455, %v1434
    %v1457 = vadd.f32 %v1456, %v1436
    %v1458 = vadd.f32 %v1457, %v1438
    %v1459 = vrot.slane %v1458, 4
    %v1460 = vadd.f32 %v1458, %v1459
    %v1461 = vrot.slane %v1460, 2
    %v1462 = vadd.f32 %v1460, %v1461
    %v1463 = vrot.slane %v1462, 1
    %v1464 = vadd.f32 %v1462, %v1463
    %v1465 = vmul.f32 %v1451, %v442
    %v1466 = vmul.f32 %v1464, %v442
    %v1467 = vsub.f32 %v1423, %v1465
    %v1468 = vsub.f32 %v1424, %v1466
    %v1469 = vsub.f32 %v1425, %v1465
    %v1470 = vsub.f32 %v1426, %v1466
    %v1471 = vsub.f32 %v1427, %v1465
    %v1472 = vsub.f32 %v1428, %v1466
    %v1473 = vsub.f32 %v1429, %v1465
    %v1474 = vsub.f32 %v1430, %v1466
    %v1475 = vsub.f32 %v1431, %v1465
    %v1476 = vsub.f32 %v1432, %v1466
    %v1477 = vsub.f32 %v1433, %v1465
    %v1478 = vsub.f32 %v1434, %v1466
    %v1479 = vsub.f32 %v1435, %v1465
    %v1480 = vsub.f32 %v1436, %v1466
    %v1481 = vsub.f32 %v1437, %v1465
    %v1482 = vsub.f32 %v1438, %v1466
    %v1483 = vmul.f32 %v1467, %v1467
    %v1484 = vmul.f32 %v1468, %v1468
    %v1485 = vmul.f32 %v1469, %v1469
    %v1486 = vmul.f32 %v1470, %v1470
    %v1487 = vmul.f32 %v1471, %v1471
    %v1488 = vmul.f32 %v1472, %v1472
    %v1489 = vmul.f32 %v1473, %v1473
    %v1490 = vmul.f32 %v1474, %v1474
    %v1491 = vmul.f32 %v1475, %v1475
    %v1492 = vmul.f32 %v1476, %v1476
    %v1493 = vmul.f32 %v1477, %v1477
    %v1494 = vmul.f32 %v1478, %v1478
    %v1495 = vmul.f32 %v1479, %v1479
    %v1496 = vmul.f32 %v1480, %v1480
    %v1497 = vmul.f32 %v1481, %v1481
    %v1498 = vmul.f32 %v1482, %v1482
    %v1499 = vadd.f32 %v1483, %v1485
    %v1500 = vadd.f32 %v1499, %v1487
    %v1501 = vadd.f32 %v1500, %v1489
    %v1502 = vadd.f32 %v1501, %v1491
    %v1503 = vadd.f32 %v1502, %v1493
    %v1504 = vadd.f32 %v1503, %v1495
    %v1505 = vadd.f32 %v1504, %v1497
    %v1506 = vrot.slane %v1505, 4
    %v1507 = vadd.f32 %v1505, %v1506
    %v1508 = vrot.slane %v1507, 2
    %v1509 = vadd.f32 %v1507, %v1508
    %v1510 = vrot.slane %v1509, 1
    %v1511 = vadd.f32 %v1509, %v1510
    %v1512 = vadd.f32 %v1484, %v1486
    %v1513 = vadd.f32 %v1512, %v1488
    %v1514 = vadd.f32 %v1513, %v1490
    %v1515 = vadd.f32 %v1514, %v1492
    %v1516 = vadd.f32 %v1515, %v1494
    %v1517 = vadd.f32 %v1516, %v1496
    %v1518 = vadd.f32 %v1517, %v1498
    %v1519 = vrot.slane %v1518, 4
    %v1520 = vadd.f32 %v1518, %v1519
    %v1521 = vrot.slane %v1520, 2
    %v1522 = vadd.f32 %v1520, %v1521
    %v1523 = vrot.slane %v1522, 1
    %v1524 = vadd.f32 %v1522, %v1523
    %v1525 = vmul.f32 %v1511, %v442
    %v1526 = vmul.f32 %v1524, %v442
    %v1527 = vadd.f32 %v1525, 1e-05
    %v1528 = vadd.f32 %v1526, 1e-05
    %v1529 = vrsqrt.pop %v1527
    %v1530 = vrsqrt.pop %v1528
    %v1531 = vmul.f32 %v1467, %v1529
    %v1532 = vmul.f32 %v1468, %v1530
    %v1533 = vmul.f32 %v1469, %v1529
    %v1534 = vmul.f32 %v1470, %v1530
    %v1535 = vmul.f32 %v1471, %v1529
    %v1536 = vmul.f32 %v1472, %v1530
    %v1537 = vmul.f32 %v1473, %v1529
    %v1538 = vmul.f32 %v1474, %v1530
    %v1539 = vmul.f32 %v1475, %v1529
    %v1540 = vmul.f32 %v1476, %v1530
    %v1541 = vmul.f32 %v1477, %v1529
    %v1542 = vmul.f32 %v1478, %v1530
    %v1543 = vmul.f32 %v1479, %v1529
    %v1544 = vmul.f32 %v1480, %v1530
    %v1545 = vmul.f32 %v1481, %v1529
    %v1546 = vmul.f32 %v1482, %v1530
    %1547 = vset.pattern.permute.xlu0 6
    %1548 = vperm.xlu0 %1547, %v36
    %v1549 = vpop.permute.xlu0 %1548
    %1551 = vset.pattern.permute.xlu0 6
    %1552 = vperm.xlu0 %1551, %v37
    %v1553 = vpop.permute.xlu0 %1552
    %1555 = vset.pattern.permute.xlu0 6
    %1556 = vperm.xlu0 %1555, %v38
    %v1557 = vpop.permute.xlu0 %1556
    %1559 = vset.pattern.permute.xlu0 6
    %1560 = vperm.xlu0 %1559, %v39
    %v1561 = vpop.permute.xlu0 %1560
    %1563 = vset.pattern.permute.xlu0 6
    %1564 = vperm.xlu0 %1563, %v40
    %v1565 = vpop.permute.xlu0 %1564
    %1567 = vset.pattern.permute.xlu0 6
    %1568 = vperm.xlu0 %1567, %v41
    %v1569 = vpop.permute.xlu0 %1568
    %1571 = vset.pattern.permute.xlu0 6
    %1572 = vperm.xlu0 %1571, %v42
    %v1573 = vpop.permute.xlu0 %1572
    %1575 = vset.pattern.permute.xlu0 6
    %1576 = vperm.xlu0 %1575, %v43
    %v1577 = vpop.permute.xlu0 %1576
    %v1579 = vmul.f32 %v1531, %v1549
    %v1580 = vmul.f32 %v1532, %v1549
    %v1581 = vmul.f32 %v1533, %v1553
    %v1582 = vmul.f32 %v1534, %v1553
    %v1583 = vmul.f32 %v1535, %v1557
    %v1584 = vmul.f32 %v1536, %v1557
    %v1585 = vmul.f32 %v1537, %v1561
    %v1586 = vmul.f32 %v1538, %v1561
    %v1587 = vmul.f32 %v1539, %v1565
    %v1588 = vmul.f32 %v1540, %v1565
    %v1589 = vmul.f32 %v1541, %v1569
    %v1590 = vmul.f32 %v1542, %v1569
    %v1591 = vmul.f32 %v1543, %v1573
    %v1592 = vmul.f32 %v1544, %v1573
    %v1593 = vmul.f32 %v1545, %v1577
    %v1594 = vmul.f32 %v1546, %v1577
    %1595 = vset.pattern.permute.xlu0 7
    %1596 = vperm.xlu0 %1595, %v36
    %v1597 = vpop.permute.xlu0 %1596
    %1599 = vset.pattern.permute.xlu0 7
    %1600 = vperm.xlu0 %1599, %v37
    %v1601 = vpop.permute.xlu0 %1600
    %1603 = vset.pattern.permute.xlu0 7
    %1604 = vperm.xlu0 %1603, %v38
    %v1605 = vpop.permute.xlu0 %1604
    %1607 = vset.pattern.permute.xlu0 7
    %1608 = vperm.xlu0 %1607, %v39
    %v1609 = vpop.permute.xlu0 %1608
    %1611 = vset.pattern.permute.xlu0 7
    %1612 = vperm.xlu0 %1611, %v40
    %v1613 = vpop.permute.xlu0 %1612
    %1615 = vset.pattern.permute.xlu0 7
    %1616 = vperm.xlu0 %1615, %v41
    %v1617 = vpop.permute.xlu0 %1616
    %1619 = vset.pattern.permute.xlu0 7
    %1620 = vperm.xlu0 %1619, %v42
    %v1621 = vpop.permute.xlu0 %1620
    %1623 = vset.pattern.permute.xlu0 7
    %1624 = vperm.xlu0 %1623, %v43
    %v1625 = vpop.permute.xlu0 %1624
    %v1627 = vadd.f32 %v1579, %v1597
    %v1628 = vadd.f32 %v1580, %v1597
    %v1629 = vadd.f32 %v1581, %v1601
    %v1630 = vadd.f32 %v1582, %v1601
    %v1631 = vadd.f32 %v1583, %v1605
    %v1632 = vadd.f32 %v1584, %v1605
    %v1633 = vadd.f32 %v1585, %v1609
    %v1634 = vadd.f32 %v1586, %v1609
    %v1635 = vadd.f32 %v1587, %v1613
    %v1636 = vadd.f32 %v1588, %v1613
    %v1637 = vadd.f32 %v1589, %v1617
    %v1638 = vadd.f32 %v1590, %v1617
    %v1639 = vadd.f32 %v1591, %v1621
    %v1640 = vadd.f32 %v1592, %v1621
    %v1641 = vadd.f32 %v1593, %v1625
    %v1642 = vadd.f32 %v1594, %v1625
    %s1643 = scalar_lea.vmem %s2, 64
    %v1644 = vld [vmem:[%s1643] sm:$0xff]
    %v1645 = vld [vmem:[%s1643 + $0x8] sm:$0xff]
    %v1646 = vld [vmem:[%s1643 + $0x10] sm:$0xff]
    %v1647 = vld [vmem:[%s1643 + $0x18] sm:$0xff]
    %v1648 = vld [vmem:[%s1643 + $0x20] sm:$0xff]
    %v1649 = vld [vmem:[%s1643 + $0x28] sm:$0xff]
    %v1650 = vld [vmem:[%s1643 + $0x30] sm:$0xff]
    %v1651 = vld [vmem:[%s1643 + $0x38] sm:$0xff]
    %1652 = vset.pattern.permute.xlu0 8
    %1653 = vperm.xlu0 %1652, %v36
    %v1654 = vpop.permute.xlu0 %1653
    %1656 = vset.pattern.permute.xlu0 8
    %1657 = vperm.xlu0 %1656, %v37
    %v1658 = vpop.permute.xlu0 %1657
    %1660 = vset.pattern.permute.xlu0 8
    %1661 = vperm.xlu0 %1660, %v38
    %v1662 = vpop.permute.xlu0 %1661
    %1664 = vset.pattern.permute.xlu0 8
    %1665 = vperm.xlu0 %1664, %v39
    %v1666 = vpop.permute.xlu0 %1665
    %1668 = vset.pattern.permute.xlu0 8
    %1669 = vperm.xlu0 %1668, %v40
    %v1670 = vpop.permute.xlu0 %1669
    %1672 = vset.pattern.permute.xlu0 8
    %1673 = vperm.xlu0 %1672, %v41
    %v1674 = vpop.permute.xlu0 %1673
    %1676 = vset.pattern.permute.xlu0 8
    %1677 = vperm.xlu0 %1676, %v42
    %v1678 = vpop.permute.xlu0 %1677
    %1680 = vset.pattern.permute.xlu0 8
    %1681 = vperm.xlu0 %1680, %v43
    %v1682 = vpop.permute.xlu0 %1681
    %v1685 = vsel %vm262, %v1644, 0
    %v1688 = vsel %vm262, %v1645, 0
    %v1691 = vsel %vm262, %v1646, 0
    %v1694 = vsel %vm262, %v1647, 0
    %v1697 = vsel %vm262, %v1648, 0
    %v1700 = vsel %vm262, %v1649, 0
    %v1703 = vsel %vm262, %v1650, 0
    %v1706 = vsel %vm262, %v1651, 0
    %1708 = vmatprep.subr.mxu0 %v1628
    %1709 = vmatpush1.msra.mxu0 %v1627
    %1710 = vmatprep.subr.mxu0 %v1630
    %1711 = vmatpush1.msra.mxu0 %v1629
    %1712 = vmatprep.subr.mxu0 %v1632
    %1713 = vmatpush1.msra.mxu0 %v1631
    %1714 = vmatprep.subr.mxu0 %v1634
    %1715 = vmatpush1.msra.mxu0 %v1633
    %1716 = vmatprep.subr.mxu0 %v1636
    %1717 = vmatpush1.msra.mxu0 %v1635
    %1718 = vmatprep.subr.mxu0 %v1638
    %1719 = vmatpush1.msra.mxu0 %v1637
    %1720 = vmatprep.subr.mxu0 %v1640
    %1721 = vmatpush1.msra.mxu0 %v1639
    %1722 = vmatprep.subr.mxu0 %v1642
    %1723 = vmatpush1.msra.mxu0 %v1641
    %1724 = vmatprep.subr.mxu0 0.0
    %1725 = vmatpush1.msra.mxu0 0.0
    %1726 = vmatprep.subr.mxu0 0.0
    %1727 = vmatpush1.msra.mxu0 0.0
    %1728 = vmatprep.subr.mxu0 0.0
    %1729 = vmatpush1.msra.mxu0 0.0
    %1730 = vmatprep.subr.mxu0 0.0
    %1731 = vmatpush1.msra.mxu0 0.0
    %1732 = vmatprep.subr.mxu0 0.0
    %1733 = vmatpush1.msra.mxu0 0.0
    %1734 = vmatprep.subr.mxu0 0.0
    %1735 = vmatpush1.msra.mxu0 0.0
    %1736 = vmatprep.subr.mxu0 0.0
    %1737 = vmatpush1.msra.mxu0 0.0
    %1738 = vmatprep.subr.mxu0 0.0
    %1739 = vmatpush1.msra.mxu0 0.0
    %1740 = vmatprep.subr.mxu0 0.0
    %1741 = vmatpush1.msra.mxu0 0.0
    %1742 = vmatprep.subr.mxu0 0.0
    %1743 = vmatpush1.msra.mxu0 0.0
    %1744 = vmatprep.subr.mxu0 0.0
    %1745 = vmatpush1.msra.mxu0 0.0
    %1746 = vmatprep.subr.mxu0 0.0
    %1747 = vmatpush1.msra.mxu0 0.0
    %1748 = vmatprep.subr.mxu0 0.0
    %1749 = vmatpush1.msra.mxu0 0.0
    %1750 = vmatprep.subr.mxu0 0.0
    %1751 = vmatpush1.msra.mxu0 0.0
    %1752 = vmatprep.subr.mxu0 0.0
    %1753 = vmatpush1.msra.mxu0 0.0
    %1754 = vmatprep.subr.mxu0 0.0
    %1755 = vmatpush1.msra.mxu0 0.0
    %1756 = vmatprep.subr.mxu0 0.0
    %1757 = vmatpush1.msra.mxu0 0.0
    %1758 = vmatprep.subr.mxu0 0.0
    %1759 = vmatpush1.msra.mxu0 0.0
    %1760 = vmatprep.subr.mxu0 0.0
    %1761 = vmatpush1.msra.mxu0 0.0
    %1762 = vmatprep.subr.mxu0 0.0
    %1763 = vmatpush1.msra.mxu0 0.0
    %1764 = vmatprep.subr.mxu0 0.0
    %1765 = vmatpush1.msra.mxu0 0.0
    %1766 = vmatprep.subr.mxu0 0.0
    %1767 = vmatpush1.msra.mxu0 0.0
    %1768 = vmatprep.subr.mxu0 0.0
    %1769 = vmatpush1.msra.mxu0 0.0
    %1770 = vmatprep.subr.mxu0 0.0
    %1771 = vmatpush1.msra.mxu0 0.0
    %1772 = vmatprep.mubr.f32.mxu0 0.0
    %1773 = vmatmul.mubr.f32.gmra.mrb[0].mxu0 %v1685
    %v1774 = vpop.f32.mrb[0].mxu0
    %v1775 = vadd.f32 %v1654, %v1774
    %v1776 = vpop.f32.mrb[0].mxu0
    %v1777 = vadd.f32 %v1654, %v1776
    %1778 = vmatprep.mubr.f32.mxu0 0.0
    %1779 = vmatmul.mubr.f32.gmra.mrb[0].mxu0 %v1688
    %v1780 = vpop.f32.mrb[0].mxu0
    %v1781 = vadd.f32 %v1658, %v1780
    %v1782 = vpop.f32.mrb[0].mxu0
    %v1783 = vadd.f32 %v1658, %v1782
    %1784 = vmatprep.mubr.f32.mxu0 0.0
    %1785 = vmatmul.mubr.f32.gmra.mrb[0].mxu0 %v1691
    %v1786 = vpop.f32.mrb[0].mxu0
    %v1787 = vadd.f32 %v1662, %v1786
    %v1788 = vpop.f32.mrb[0].mxu0
    %v1789 = vadd.f32 %v1662, %v1788
    %1790 = vmatprep.mubr.f32.mxu0 0.0
    %1791 = vmatmul.mubr.f32.gmra.mrb[0].mxu0 %v1694
    %v1792 = vpop.f32.mrb[0].mxu0
    %v1793 = vadd.f32 %v1666, %v1792
    %v1794 = vpop.f32.mrb[0].mxu0
    %v1795 = vadd.f32 %v1666, %v1794
    %1796 = vmatprep.mubr.f32.mxu0 0.0
    %1797 = vmatmul.mubr.f32.gmra.mrb[0].mxu0 %v1697
    %v1798 = vpop.f32.mrb[0].mxu0
    %v1799 = vadd.f32 %v1670, %v1798
    %v1800 = vpop.f32.mrb[0].mxu0
    %v1801 = vadd.f32 %v1670, %v1800
    %1802 = vmatprep.mubr.f32.mxu0 0.0
    %1803 = vmatmul.mubr.f32.gmra.mrb[0].mxu0 %v1700
    %v1804 = vpop.f32.mrb[0].mxu0
    %v1805 = vadd.f32 %v1674, %v1804
    %v1806 = vpop.f32.mrb[0].mxu0
    %v1807 = vadd.f32 %v1674, %v1806
    %1808 = vmatprep.mubr.f32.mxu0 0.0
    %1809 = vmatmul.mubr.f32.gmra.mrb[0].mxu0 %v1703
    %v1810 = vpop.f32.mrb[0].mxu0
    %v1811 = vadd.f32 %v1678, %v1810
    %v1812 = vpop.f32.mrb[0].mxu0
    %v1813 = vadd.f32 %v1678, %v1812
    %1814 = vmatprep.mubr.f32.mxu0 0.0
    %1815 = vmatmul.mubr.f32.gmra.mrb[0].mxu0 %v1706
    %v1816 = vpop.f32.mrb[0].mxu0
    %v1817 = vadd.f32 %v1682, %v1816
    %v1818 = vpop.f32.mrb[0].mxu0
    %v1819 = vadd.f32 %v1682, %v1818
    %1820 = vdwg.mxu0
    %v1821 = vadd.f32 %v1627, %v1775
    %v1822 = vadd.f32 %v1628, %v1777
    %v1823 = vadd.f32 %v1629, %v1781
    %v1824 = vadd.f32 %v1630, %v1783
    %v1825 = vadd.f32 %v1631, %v1787
    %v1826 = vadd.f32 %v1632, %v1789
    %v1827 = vadd.f32 %v1633, %v1793
    %v1828 = vadd.f32 %v1634, %v1795
    %v1829 = vadd.f32 %v1635, %v1799
    %v1830 = vadd.f32 %v1636, %v1801
    %v1831 = vadd.f32 %v1637, %v1805
    %v1832 = vadd.f32 %v1638, %v1807
    %v1833 = vadd.f32 %v1639, %v1811
    %v1834 = vadd.f32 %v1640, %v1813
    %v1835 = vadd.f32 %v1641, %v1817
    %v1836 = vadd.f32 %v1642, %v1819
    %v1837 = vadd.f32 %v1821, %v1823
    %v1838 = vadd.f32 %v1837, %v1825
    %v1839 = vadd.f32 %v1838, %v1827
    %v1840 = vadd.f32 %v1839, %v1829
    %v1841 = vadd.f32 %v1840, %v1831
    %v1842 = vadd.f32 %v1841, %v1833
    %v1843 = vadd.f32 %v1842, %v1835
    %v1844 = vrot.slane %v1843, 4
    %v1845 = vadd.f32 %v1843, %v1844
    %v1846 = vrot.slane %v1845, 2
    %v1847 = vadd.f32 %v1845, %v1846
    %v1848 = vrot.slane %v1847, 1
    %v1849 = vadd.f32 %v1847, %v1848
    %v1850 = vadd.f32 %v1822, %v1824
    %v1851 = vadd.f32 %v1850, %v1826
    %v1852 = vadd.f32 %v1851, %v1828
    %v1853 = vadd.f32 %v1852, %v1830
    %v1854 = vadd.f32 %v1853, %v1832
    %v1855 = vadd.f32 %v1854, %v1834
    %v1856 = vadd.f32 %v1855, %v1836
    %v1857 = vrot.slane %v1856, 4
    %v1858 = vadd.f32 %v1856, %v1857
    %v1859 = vrot.slane %v1858, 2
    %v1860 = vadd.f32 %v1858, %v1859
    %v1861 = vrot.slane %v1860, 1
    %v1862 = vadd.f32 %v1860, %v1861
    %v1863 = vmul.f32 %v1849, %v442
    %v1864 = vmul.f32 %v1862, %v442
    %v1865 = vsub.f32 %v1821, %v1863
    %v1866 = vsub.f32 %v1822, %v1864
    %v1867 = vsub.f32 %v1823, %v1863
    %v1868 = vsub.f32 %v1824, %v1864
    %v1869 = vsub.f32 %v1825, %v1863
    %v1870 = vsub.f32 %v1826, %v1864
    %v1871 = vsub.f32 %v1827, %v1863
    %v1872 = vsub.f32 %v1828, %v1864
    %v1873 = vsub.f32 %v1829, %v1863
    %v1874 = vsub.f32 %v1830, %v1864
    %v1875 = vsub.f32 %v1831, %v1863
    %v1876 = vsub.f32 %v1832, %v1864
    %v1877 = vsub.f32 %v1833, %v1863
    %v1878 = vsub.f32 %v1834, %v1864
    %v1879 = vsub.f32 %v1835, %v1863
    %v1880 = vsub.f32 %v1836, %v1864
    %v1881 = vmul.f32 %v1865, %v1865
    %v1882 = vmul.f32 %v1866, %v1866
    %v1883 = vmul.f32 %v1867, %v1867
    %v1884 = vmul.f32 %v1868, %v1868
    %v1885 = vmul.f32 %v1869, %v1869
    %v1886 = vmul.f32 %v1870, %v1870
    %v1887 = vmul.f32 %v1871, %v1871
    %v1888 = vmul.f32 %v1872, %v1872
    %v1889 = vmul.f32 %v1873, %v1873
    %v1890 = vmul.f32 %v1874, %v1874
    %v1891 = vmul.f32 %v1875, %v1875
    %v1892 = vmul.f32 %v1876, %v1876
    %v1893 = vmul.f32 %v1877, %v1877
    %v1894 = vmul.f32 %v1878, %v1878
    %v1895 = vmul.f32 %v1879, %v1879
    %v1896 = vmul.f32 %v1880, %v1880
    %v1897 = vadd.f32 %v1881, %v1883
    %v1898 = vadd.f32 %v1897, %v1885
    %v1899 = vadd.f32 %v1898, %v1887
    %v1900 = vadd.f32 %v1899, %v1889
    %v1901 = vadd.f32 %v1900, %v1891
    %v1902 = vadd.f32 %v1901, %v1893
    %v1903 = vadd.f32 %v1902, %v1895
    %v1904 = vrot.slane %v1903, 4
    %v1905 = vadd.f32 %v1903, %v1904
    %v1906 = vrot.slane %v1905, 2
    %v1907 = vadd.f32 %v1905, %v1906
    %v1908 = vrot.slane %v1907, 1
    %v1909 = vadd.f32 %v1907, %v1908
    %v1910 = vadd.f32 %v1882, %v1884
    %v1911 = vadd.f32 %v1910, %v1886
    %v1912 = vadd.f32 %v1911, %v1888
    %v1913 = vadd.f32 %v1912, %v1890
    %v1914 = vadd.f32 %v1913, %v1892
    %v1915 = vadd.f32 %v1914, %v1894
    %v1916 = vadd.f32 %v1915, %v1896
    %v1917 = vrot.slane %v1916, 4
    %v1918 = vadd.f32 %v1916, %v1917
    %v1919 = vrot.slane %v1918, 2
    %v1920 = vadd.f32 %v1918, %v1919
    %v1921 = vrot.slane %v1920, 1
    %v1922 = vadd.f32 %v1920, %v1921
    %v1923 = vmul.f32 %v1909, %v442
    %v1924 = vmul.f32 %v1922, %v442
    %v1925 = vadd.f32 %v1923, 1e-05
    %v1926 = vadd.f32 %v1924, 1e-05
    %v1927 = vrsqrt.pop %v1925
    %v1928 = vrsqrt.pop %v1926
    %v1929 = vmul.f32 %v1865, %v1927
    %v1930 = vmul.f32 %v1866, %v1928
    %v1931 = vmul.f32 %v1867, %v1927
    %v1932 = vmul.f32 %v1868, %v1928
    %v1933 = vmul.f32 %v1869, %v1927
    %v1934 = vmul.f32 %v1870, %v1928
    %v1935 = vmul.f32 %v1871, %v1927
    %v1936 = vmul.f32 %v1872, %v1928
    %v1937 = vmul.f32 %v1873, %v1927
    %v1938 = vmul.f32 %v1874, %v1928
    %v1939 = vmul.f32 %v1875, %v1927
    %v1940 = vmul.f32 %v1876, %v1928
    %v1941 = vmul.f32 %v1877, %v1927
    %v1942 = vmul.f32 %v1878, %v1928
    %v1943 = vmul.f32 %v1879, %v1927
    %v1944 = vmul.f32 %v1880, %v1928
    %1945 = vset.pattern.permute.xlu0 9
    %1946 = vperm.xlu0 %1945, %v36
    %v1947 = vpop.permute.xlu0 %1946
    %1949 = vset.pattern.permute.xlu0 9
    %1950 = vperm.xlu0 %1949, %v37
    %v1951 = vpop.permute.xlu0 %1950
    %1953 = vset.pattern.permute.xlu0 9
    %1954 = vperm.xlu0 %1953, %v38
    %v1955 = vpop.permute.xlu0 %1954
    %1957 = vset.pattern.permute.xlu0 9
    %1958 = vperm.xlu0 %1957, %v39
    %v1959 = vpop.permute.xlu0 %1958
    %1961 = vset.pattern.permute.xlu0 9
    %1962 = vperm.xlu0 %1961, %v40
    %v1963 = vpop.permute.xlu0 %1962
    %1965 = vset.pattern.permute.xlu0 9
    %1966 = vperm.xlu0 %1965, %v41
    %v1967 = vpop.permute.xlu0 %1966
    %1969 = vset.pattern.permute.xlu0 9
    %1970 = vperm.xlu0 %1969, %v42
    %v1971 = vpop.permute.xlu0 %1970
    %1973 = vset.pattern.permute.xlu0 9
    %1974 = vperm.xlu0 %1973, %v43
    %v1975 = vpop.permute.xlu0 %1974
    %v1977 = vmul.f32 %v1929, %v1947
    %v1978 = vmul.f32 %v1930, %v1947
    %v1979 = vmul.f32 %v1931, %v1951
    %v1980 = vmul.f32 %v1932, %v1951
    %v1981 = vmul.f32 %v1933, %v1955
    %v1982 = vmul.f32 %v1934, %v1955
    %v1983 = vmul.f32 %v1935, %v1959
    %v1984 = vmul.f32 %v1936, %v1959
    %v1985 = vmul.f32 %v1937, %v1963
    %v1986 = vmul.f32 %v1938, %v1963
    %v1987 = vmul.f32 %v1939, %v1967
    %v1988 = vmul.f32 %v1940, %v1967
    %v1989 = vmul.f32 %v1941, %v1971
    %v1990 = vmul.f32 %v1942, %v1971
    %v1991 = vmul.f32 %v1943, %v1975
    %v1992 = vmul.f32 %v1944, %v1975
    %1993 = vset.pattern.permute.xlu0 10
    %1994 = vperm.xlu0 %1993, %v36
    %v1995 = vpop.permute.xlu0 %1994
    %1997 = vset.pattern.permute.xlu0 10
    %1998 = vperm.xlu0 %1997, %v37
    %v1999 = vpop.permute.xlu0 %1998
    %2001 = vset.pattern.permute.xlu0 10
    %2002 = vperm.xlu0 %2001, %v38
    %v2003 = vpop.permute.xlu0 %2002
    %2005 = vset.pattern.permute.xlu0 10
    %2006 = vperm.xlu0 %2005, %v39
    %v2007 = vpop.permute.xlu0 %2006
    %2009 = vset.pattern.permute.xlu0 10
    %2010 = vperm.xlu0 %2009, %v40
    %v2011 = vpop.permute.xlu0 %2010
    %2013 = vset.pattern.permute.xlu0 10
    %2014 = vperm.xlu0 %2013, %v41
    %v2015 = vpop.permute.xlu0 %2014
    %2017 = vset.pattern.permute.xlu0 10
    %2018 = vperm.xlu0 %2017, %v42
    %v2019 = vpop.permute.xlu0 %2018
    %2021 = vset.pattern.permute.xlu0 10
    %2022 = vperm.xlu0 %2021, %v43
    %v2023 = vpop.permute.xlu0 %2022
    %v2025 = vadd.f32 %v1977, %v1995
    %v2026 = vadd.f32 %v1978, %v1995
    %v2027 = vadd.f32 %v1979, %v1999
    %v2028 = vadd.f32 %v1980, %v1999
    %v2029 = vadd.f32 %v1981, %v2003
    %v2030 = vadd.f32 %v1982, %v2003
    %v2031 = vadd.f32 %v1983, %v2007
    %v2032 = vadd.f32 %v1984, %v2007
    %v2033 = vadd.f32 %v1985, %v2011
    %v2034 = vadd.f32 %v1986, %v2011
    %v2035 = vadd.f32 %v1987, %v2015
    %v2036 = vadd.f32 %v1988, %v2015
    %v2037 = vadd.f32 %v1989, %v2019
    %v2038 = vadd.f32 %v1990, %v2019
    %v2039 = vadd.f32 %v1991, %v2023
    %v2040 = vadd.f32 %v1992, %v2023
    %s2041 = scalar_lea.vmem %s3, 256
    %v2042 = vld [vmem:[%s2041] sm:$0xff]
    %v2043 = vld [vmem:[%s2041 + $0x8] sm:$0xff]
    %v2044 = vld [vmem:[%s2041 + $0x10] sm:$0xff]
    %v2045 = vld [vmem:[%s2041 + $0x18] sm:$0xff]
    %v2046 = vld [vmem:[%s2041 + $0x20] sm:$0xff]
    %v2047 = vld [vmem:[%s2041 + $0x28] sm:$0xff]
    %v2048 = vld [vmem:[%s2041 + $0x30] sm:$0xff]
    %v2049 = vld [vmem:[%s2041 + $0x38] sm:$0xff]
    %v2050 = vld [vmem:[%s2041 + $0x40] sm:$0xff]
    %v2051 = vld [vmem:[%s2041 + $0x48] sm:$0xff]
    %v2052 = vld [vmem:[%s2041 + $0x50] sm:$0xff]
    %v2053 = vld [vmem:[%s2041 + $0x58] sm:$0xff]
    %v2054 = vld [vmem:[%s2041 + $0x60] sm:$0xff]
    %v2055 = vld [vmem:[%s2041 + $0x68] sm:$0xff]
    %v2056 = vld [vmem:[%s2041 + $0x70] sm:$0xff]
    %v2057 = vld [vmem:[%s2041 + $0x78] sm:$0xff]
    %v2058 = vld [vmem:[%s2041 + $0x80] sm:$0xff]
    %v2059 = vld [vmem:[%s2041 + $0x88] sm:$0xff]
    %v2060 = vld [vmem:[%s2041 + $0x90] sm:$0xff]
    %v2061 = vld [vmem:[%s2041 + $0x98] sm:$0xff]
    %v2062 = vld [vmem:[%s2041 + $0xa0] sm:$0xff]
    %v2063 = vld [vmem:[%s2041 + $0xa8] sm:$0xff]
    %v2064 = vld [vmem:[%s2041 + $0xb0] sm:$0xff]
    %v2065 = vld [vmem:[%s2041 + $0xb8] sm:$0xff]
    %v2066 = vld [vmem:[%s2041 + $0xc0] sm:$0xff]
    %v2067 = vld [vmem:[%s2041 + $0xc8] sm:$0xff]
    %v2068 = vld [vmem:[%s2041 + $0xd0] sm:$0xff]
    %v2069 = vld [vmem:[%s2041 + $0xd8] sm:$0xff]
    %v2070 = vld [vmem:[%s2041 + $0xe0] sm:$0xff]
    %v2071 = vld [vmem:[%s2041 + $0xe8] sm:$0xff]
    %v2072 = vld [vmem:[%s2041 + $0xf0] sm:$0xff]
    %v2073 = vld [vmem:[%s2041 + $0xf8] sm:$0xff]
    %2074 = vset.pattern.permute.xlu0 11
    %2075 = vperm.xlu0 %2074, %v653
    %v2076 = vpop.permute.xlu0 %2075
    %2078 = vset.pattern.permute.xlu0 11
    %2079 = vperm.xlu0 %2078, %v654
    %v2080 = vpop.permute.xlu0 %2079
    %2082 = vset.pattern.permute.xlu0 11
    %2083 = vperm.xlu0 %2082, %v655
    %v2084 = vpop.permute.xlu0 %2083
    %2086 = vset.pattern.permute.xlu0 11
    %2087 = vperm.xlu0 %2086, %v656
    %v2088 = vpop.permute.xlu0 %2087
    %2090 = vset.pattern.permute.xlu0 11
    %2091 = vperm.xlu0 %2090, %v657
    %v2092 = vpop.permute.xlu0 %2091
    %2094 = vset.pattern.permute.xlu0 11
    %2095 = vperm.xlu0 %2094, %v658
    %v2096 = vpop.permute.xlu0 %2095
    %2098 = vset.pattern.permute.xlu0 11
    %2099 = vperm.xlu0 %2098, %v659
    %v2100 = vpop.permute.xlu0 %2099
    %2102 = vset.pattern.permute.xlu0 11
    %2103 = vperm.xlu0 %2102, %v660
    %v2104 = vpop.permute.xlu0 %2103
    %2106 = vset.pattern.permute.xlu0 11
    %2107 = vperm.xlu0 %2106, %v661
    %v2108 = vpop.permute.xlu0 %2107
    %2110 = vset.pattern.permute.xlu0 11
    %2111 = vperm.xlu0 %2110, %v662
    %v2112 = vpop.permute.xlu0 %2111
    %2114 = vset.pattern.permute.xlu0 11
    %2115 = vperm.xlu0 %2114, %v663
    %v2116 = vpop.permute.xlu0 %2115
    %2118 = vset.pattern.permute.xlu0 11
    %2119 = vperm.xlu0 %2118, %v664
    %v2120 = vpop.permute.xlu0 %2119
    %2122 = vset.pattern.permute.xlu0 11
    %2123 = vperm.xlu0 %2122, %v665
    %v2124 = vpop.permute.xlu0 %2123
    %2126 = vset.pattern.permute.xlu0 11
    %2127 = vperm.xlu0 %2126, %v666
    %v2128 = vpop.permute.xlu0 %2127
    %2130 = vset.pattern.permute.xlu0 11
    %2131 = vperm.xlu0 %2130, %v667
    %v2132 = vpop.permute.xlu0 %2131
    %2134 = vset.pattern.permute.xlu0 11
    %2135 = vperm.xlu0 %2134, %v668
    %v2136 = vpop.permute.xlu0 %2135
    %2138 = vset.pattern.permute.xlu0 11
    %2139 = vperm.xlu0 %2138, %v669
    %v2140 = vpop.permute.xlu0 %2139
    %2142 = vset.pattern.permute.xlu0 11
    %2143 = vperm.xlu0 %2142, %v670
    %v2144 = vpop.permute.xlu0 %2143
    %2146 = vset.pattern.permute.xlu0 11
    %2147 = vperm.xlu0 %2146, %v671
    %v2148 = vpop.permute.xlu0 %2147
    %2150 = vset.pattern.permute.xlu0 11
    %2151 = vperm.xlu0 %2150, %v672
    %v2152 = vpop.permute.xlu0 %2151
    %2154 = vset.pattern.permute.xlu0 11
    %2155 = vperm.xlu0 %2154, %v673
    %v2156 = vpop.permute.xlu0 %2155
    %2158 = vset.pattern.permute.xlu0 11
    %2159 = vperm.xlu0 %2158, %v674
    %v2160 = vpop.permute.xlu0 %2159
    %2162 = vset.pattern.permute.xlu0 11
    %2163 = vperm.xlu0 %2162, %v675
    %v2164 = vpop.permute.xlu0 %2163
    %2166 = vset.pattern.permute.xlu0 11
    %2167 = vperm.xlu0 %2166, %v676
    %v2168 = vpop.permute.xlu0 %2167
    %2170 = vset.pattern.permute.xlu0 11
    %2171 = vperm.xlu0 %2170, %v677
    %v2172 = vpop.permute.xlu0 %2171
    %2174 = vset.pattern.permute.xlu0 11
    %2175 = vperm.xlu0 %2174, %v678
    %v2176 = vpop.permute.xlu0 %2175
    %2178 = vset.pattern.permute.xlu0 11
    %2179 = vperm.xlu0 %2178, %v679
    %v2180 = vpop.permute.xlu0 %2179
    %2182 = vset.pattern.permute.xlu0 11
    %2183 = vperm.xlu0 %2182, %v680
    %v2184 = vpop.permute.xlu0 %2183
    %2186 = vset.pattern.permute.xlu0 11
    %2187 = vperm.xlu0 %2186, %v681
    %v2188 = vpop.permute.xlu0 %2187
    %2190 = vset.pattern.permute.xlu0 11
    %2191 = vperm.xlu0 %2190, %v682
    %v2192 = vpop.permute.xlu0 %2191
    %2194 = vset.pattern.permute.xlu0 11
    %2195 = vperm.xlu0 %2194, %v683
    %v2196 = vpop.permute.xlu0 %2195
    %2198 = vset.pattern.permute.xlu0 11
    %2199 = vperm.xlu0 %2198, %v684
    %v2200 = vpop.permute.xlu0 %2199
    %v2203 = vsel %vm262, %v2042, 0
    %v2206 = vsel %vm262, %v2043, 0
    %v2209 = vsel %vm262, %v2044, 0
    %v2212 = vsel %vm262, %v2045, 0
    %v2215 = vsel %vm262, %v2046, 0
    %v2218 = vsel %vm262, %v2047, 0
    %v2221 = vsel %vm262, %v2048, 0
    %v2224 = vsel %vm262, %v2049, 0
    %v2227 = vsel %vm262, %v2050, 0
    %v2230 = vsel %vm262, %v2051, 0
    %v2233 = vsel %vm262, %v2052, 0
    %v2236 = vsel %vm262, %v2053, 0
    %v2239 = vsel %vm262, %v2054, 0
    %v2242 = vsel %vm262, %v2055, 0
    %v2245 = vsel %vm262, %v2056, 0
    %v2248 = vsel %vm262, %v2057, 0
    %v2251 = vsel %vm262, %v2058, 0
    %v2254 = vsel %vm262, %v2059, 0
    %v2257 = vsel %vm262, %v2060, 0
    %v2260 = vsel %vm262, %v2061, 0
    %v2263 = vsel %vm262, %v2062, 0
    %v2266 = vsel %vm262, %v2063, 0
    %v2269 = vsel %vm262, %v2064, 0
    %v2272 = vsel %vm262, %v2065, 0
    %v2275 = vsel %vm262, %v2066, 0
    %v2278 = vsel %vm262, %v2067, 0
    %v2281 = vsel %vm262, %v2068, 0
    %v2284 = vsel %vm262, %v2069, 0
    %v2287 = vsel %vm262, %v2070, 0
    %v2290 = vsel %vm262, %v2071, 0
    %v2293 = vsel %vm262, %v2072, 0
    %v2296 = vsel %vm262, %v2073, 0
    %2298 = vmatprep.subr.mxu0 %v2026
    %2299 = vmatpush1.msra.mxu0 %v2025
    %2300 = vmatprep.subr.mxu0 %v2028
    %2301 = vmatpush1.msra.mxu0 %v2027
    %2302 = vmatprep.subr.mxu0 %v2030
    %2303 = vmatpush1.msra.mxu0 %v2029
    %2304 = vmatprep.subr.mxu0 %v2032
    %2305 = vmatpush1.msra.mxu0 %v2031
    %2306 = vmatprep.subr.mxu0 %v2034
    %2307 = vmatpush1.msra.mxu0 %v2033
    %2308 = vmatprep.subr.mxu0 %v2036
    %2309 = vmatpush1.msra.mxu0 %v2035
    %2310 = vmatprep.subr.mxu0 %v2038
    %2311 = vmatpush1.msra.mxu0 %v2037
    %2312 = vmatprep.subr.mxu0 %v2040
    %2313 = vmatpush1.msra.mxu0 %v2039
    %2314 = vmatprep.subr.mxu0 0.0
    %2315 = vmatpush1.msra.mxu0 0.0
    %2316 = vmatprep.subr.mxu0 0.0
    %2317 = vmatpush1.msra.mxu0 0.0
    %2318 = vmatprep.subr.mxu0 0.0
    %2319 = vmatpush1.msra.mxu0 0.0
    %2320 = vmatprep.subr.mxu0 0.0
    %2321 = vmatpush1.msra.mxu0 0.0
    %2322 = vmatprep.subr.mxu0 0.0
    %2323 = vmatpush1.msra.mxu0 0.0
    %2324 = vmatprep.subr.mxu0 0.0
    %2325 = vmatpush1.msra.mxu0 0.0
    %2326 = vmatprep.subr.mxu0 0.0
    %2327 = vmatpush1.msra.mxu0 0.0
    %2328 = vmatprep.subr.mxu0 0.0
    %2329 = vmatpush1.msra.mxu0 0.0
    %2330 = vmatprep.subr.mxu0 0.0
    %2331 = vmatpush1.msra.mxu0 0.0
    %2332 = vmatprep.subr.mxu0 0.0
    %2333 = vmatpush1.msra.mxu0 0.0
    %2334 = vmatprep.subr.mxu0 0.0
    %2335 = vmatpush1.msra.mxu0 0.0
    %2336 = vmatprep.subr.mxu0 0.0
    %2337 = vmatpush1.msra.mxu0 0.0
    %2338 = vmatprep.subr.mxu0 0.0
    %2339 = vmatpush1.msra.mxu0 0.0
    %2340 = vmatprep.subr.mxu0 0.0
    %2341 = vmatpush1.msra.mxu0 0.0
    %2342 = vmatprep.subr.mxu0 0.0
    %2343 = vmatpush1.msra.mxu0 0.0
    %2344 = vmatprep.subr.mxu0 0.0
    %2345 = vmatpush1.msra.mxu0 0.0
    %2346 = vmatprep.subr.mxu0 0.0
    %2347 = vmatpush1.msra.mxu0 0.0
    %2348 = vmatprep.subr.mxu0 0.0
    %2349 = vmatpush1.msra.mxu0 0.0
    %2350 = vmatprep.subr.mxu0 0.0
    %2351 = vmatpush1.msra.mxu0 0.0
    %2352 = vmatprep.subr.mxu0 0.0
    %2353 = vmatpush1.msra.mxu0 0.0
    %2354 = vmatprep.subr.mxu0 0.0
    %2355 = vmatpush1.msra.mxu0 0.0
    %2356 = vmatprep.subr.mxu0 0.0
    %2357 = vmatpush1.msra.mxu0 0.0
    %2358 = vmatprep.subr.mxu0 0.0
    %2359 = vmatpush1.msra.mxu0 0.0
    %2360 = vmatprep.subr.mxu0 0.0
    %2361 = vmatpush1.msra.mxu0 0.0
    %2362 = vmatprep.mubr.f32.mxu0 0.0
    %2363 = vmatmul.mubr.f32.gmra.mrb[0].mxu0 %v2203
    %v2364 = vpop.f32.mrb[0].mxu0
    %v2365 = vadd.f32 %v2076, %v2364
    %v2366 = vpop.f32.mrb[0].mxu0
    %v2367 = vadd.f32 %v2076, %v2366
    %2368 = vmatprep.mubr.f32.mxu0 0.0
    %2369 = vmatmul.mubr.f32.gmra.mrb[0].mxu0 %v2206
    %v2370 = vpop.f32.mrb[0].mxu0
    %v2371 = vadd.f32 %v2080, %v2370
    %v2372 = vpop.f32.mrb[0].mxu0
    %v2373 = vadd.f32 %v2080, %v2372
    %2374 = vmatprep.mubr.f32.mxu0 0.0
    %2375 = vmatmul.mubr.f32.gmra.mrb[0].mxu0 %v2209
    %v2376 = vpop.f32.mrb[0].mxu0
    %v2377 = vadd.f32 %v2084, %v2376
    %v2378 = vpop.f32.mrb[0].mxu0
    %v2379 = vadd.f32 %v2084, %v2378
    %2380 = vmatprep.mubr.f32.mxu0 0.0
    %2381 = vmatmul.mubr.f32.gmra.mrb[0].mxu0 %v2212
    %v2382 = vpop.f32.mrb[0].mxu0
    %v2383 = vadd.f32 %v2088, %v2382
    %v2384 = vpop.f32.mrb[0].mxu0
    %v2385 = vadd.f32 %v2088, %v2384
    %2386 = vmatprep.mubr.f32.mxu0 0.0
    %2387 = vmatmul.mubr.f32.gmra.mrb[0].mxu0 %v2215
    %v2388 = vpop.f32.mrb[0].mxu0
    %v2389 = vadd.f32 %v2092, %v2388
    %v2390 = vpop.f32.mrb[0].mxu0
    %v2391 = vadd.f32 %v2092, %v2390
    %2392 = vmatprep.mubr.f32.mxu0 0.0
    %2393 = vmatmul.mubr.f32.gmra.mrb[0].mxu0 %v2218
    %v2394 = vpop.f32.mrb[0].mxu0
    %v2395 = vadd.f32 %v2096, %v2394
    %v2396 = vpop.f32.mrb[0].mxu0
    %v2397 = vadd.f32 %v2096, %v2396
    %2398 = vmatprep.mubr.f32.mxu0 0.0
    %2399 = vmatmul.mubr.f32.gmra.mrb[0].mxu0 %v2221
    %v2400 = vpop.f32.mrb[0].mxu0
    %v2401 = vadd.f32 %v2100, %v2400
    %v2402 = vpop.f32.mrb[0].mxu0
    %v2403 = vadd.f32 %v2100, %v2402
    %2404 = vmatprep.mubr.f32.mxu0 0.0
    %2405 = vmatmul.mubr.f32.gmra.mrb[0].mxu0 %v2224
    %v2406 = vpop.f32.mrb[0].mxu0
    %v2407 = vadd.f32 %v2104, %v2406
    %v2408 = vpop.f32.mrb[0].mxu0
    %v2409 = vadd.f32 %v2104, %v2408
    %2410 = vmatprep.mubr.f32.mxu0 0.0
    %2411 = vmatmul.mubr.f32.gmra.mrb[0].mxu0 %v2227
    %v2412 = vpop.f32.mrb[0].mxu0
    %v2413 = vadd.f32 %v2108, %v2412
    %v2414 = vpop.f32.mrb[0].mxu0
    %v2415 = vadd.f32 %v2108, %v2414
    %2416 = vmatprep.mubr.f32.mxu0 0.0
    %2417 = vmatmul.mubr.f32.gmra.mrb[0].mxu0 %v2230
    %v2418 = vpop.f32.mrb[0].mxu0
    %v2419 = vadd.f32 %v2112, %v2418
    %v2420 = vpop.f32.mrb[0].mxu0
    %v2421 = vadd.f32 %v2112, %v2420
    %2422 = vmatprep.mubr.f32.mxu0 0.0
    %2423 = vmatmul.mubr.f32.gmra.mrb[0].mxu0 %v2233
    %v2424 = vpop.f32.mrb[0].mxu0
    %v2425 = vadd.f32 %v2116, %v2424
    %v2426 = vpop.f32.mrb[0].mxu0
    %v2427 = vadd.f32 %v2116, %v2426
    %2428 = vmatprep.mubr.f32.mxu0 0.0
    %2429 = vmatmul.mubr.f32.gmra.mrb[0].mxu0 %v2236
    %v2430 = vpop.f32.mrb[0].mxu0
    %v2431 = vadd.f32 %v2120, %v2430
    %v2432 = vpop.f32.mrb[0].mxu0
    %v2433 = vadd.f32 %v2120, %v2432
    %2434 = vmatprep.mubr.f32.mxu0 0.0
    %2435 = vmatmul.mubr.f32.gmra.mrb[0].mxu0 %v2239
    %v2436 = vpop.f32.mrb[0].mxu0
    %v2437 = vadd.f32 %v2124, %v2436
    %v2438 = vpop.f32.mrb[0].mxu0
    %v2439 = vadd.f32 %v2124, %v2438
    %2440 = vmatprep.mubr.f32.mxu0 0.0
    %2441 = vmatmul.mubr.f32.gmra.mrb[0].mxu0 %v2242
    %v2442 = vpop.f32.mrb[0].mxu0
    %v2443 = vadd.f32 %v2128, %v2442
    %v2444 = vpop.f32.mrb[0].mxu0
    %v2445 = vadd.f32 %v2128, %v2444
    %2446 = vmatprep.mubr.f32.mxu0 0.0
    %2447 = vmatmul.mubr.f32.gmra.mrb[0].mxu0 %v2245
    %v2448 = vpop.f32.mrb[0].mxu0
    %v2449 = vadd.f32 %v2132, %v2448
    %v2450 = vpop.f32.mrb[0].mxu0
    %v2451 = vadd.f32 %v2132, %v2450
    %2452 = vmatprep.mubr.f32.mxu0 0.0
    %2453 = vmatmul.mubr.f32.gmra.mrb[0].mxu0 %v2248
    %v2454 = vpop.f32.mrb[0].mxu0
    %v2455 = vadd.f32 %v2136, %v2454
    %v2456 = vpop.f32.mrb[0].mxu0
    %v2457 = vadd.f32 %v2136, %v2456
    %2458 = vmatprep.mubr.f32.mxu0 0.0
    %2459 = vmatmul.mubr.f32.gmra.mrb[0].mxu0 %v2251
    %v2460 = vpop.f32.mrb[0].mxu0
    %v2461 = vadd.f32 %v2140, %v2460
    %v2462 = vpop.f32.mrb[0].mxu0
    %v2463 = vadd.f32 %v2140, %v2462
    %2464 = vmatprep.mubr.f32.mxu0 0.0
    %2465 = vmatmul.mubr.f32.gmra.mrb[0].mxu0 %v2254
    %v2466 = vpop.f32.mrb[0].mxu0
    %v2467 = vadd.f32 %v2144, %v2466
    %v2468 = vpop.f32.mrb[0].mxu0
    %v2469 = vadd.f32 %v2144, %v2468
    %2470 = vmatprep.mubr.f32.mxu0 0.0
    %2471 = vmatmul.mubr.f32.gmra.mrb[0].mxu0 %v2257
    %v2472 = vpop.f32.mrb[0].mxu0
    %v2473 = vadd.f32 %v2148, %v2472
    %v2474 = vpop.f32.mrb[0].mxu0
    %v2475 = vadd.f32 %v2148, %v2474
    %2476 = vmatprep.mubr.f32.mxu0 0.0
    %2477 = vmatmul.mubr.f32.gmra.mrb[0].mxu0 %v2260
    %v2478 = vpop.f32.mrb[0].mxu0
    %v2479 = vadd.f32 %v2152, %v2478
    %v2480 = vpop.f32.mrb[0].mxu0
    %v2481 = vadd.f32 %v2152, %v2480
    %2482 = vmatprep.mubr.f32.mxu0 0.0
    %2483 = vmatmul.mubr.f32.gmra.mrb[0].mxu0 %v2263
    %v2484 = vpop.f32.mrb[0].mxu0
    %v2485 = vadd.f32 %v2156, %v2484
    %v2486 = vpop.f32.mrb[0].mxu0
    %v2487 = vadd.f32 %v2156, %v2486
    %2488 = vmatprep.mubr.f32.mxu0 0.0
    %2489 = vmatmul.mubr.f32.gmra.mrb[0].mxu0 %v2266
    %v2490 = vpop.f32.mrb[0].mxu0
    %v2491 = vadd.f32 %v2160, %v2490
    %v2492 = vpop.f32.mrb[0].mxu0
    %v2493 = vadd.f32 %v2160, %v2492
    %2494 = vmatprep.mubr.f32.mxu0 0.0
    %2495 = vmatmul.mubr.f32.gmra.mrb[0].mxu0 %v2269
    %v2496 = vpop.f32.mrb[0].mxu0
    %v2497 = vadd.f32 %v2164, %v2496
    %v2498 = vpop.f32.mrb[0].mxu0
    %v2499 = vadd.f32 %v2164, %v2498
    %2500 = vmatprep.mubr.f32.mxu0 0.0
    %2501 = vmatmul.mubr.f32.gmra.mrb[0].mxu0 %v2272
    %v2502 = vpop.f32.mrb[0].mxu0
    %v2503 = vadd.f32 %v2168, %v2502
    %v2504 = vpop.f32.mrb[0].mxu0
    %v2505 = vadd.f32 %v2168, %v2504
    %2506 = vmatprep.mubr.f32.mxu0 0.0
    %2507 = vmatmul.mubr.f32.gmra.mrb[0].mxu0 %v2275
    %v2508 = vpop.f32.mrb[0].mxu0
    %v2509 = vadd.f32 %v2172, %v2508
    %v2510 = vpop.f32.mrb[0].mxu0
    %v2511 = vadd.f32 %v2172, %v2510
    %2512 = vmatprep.mubr.f32.mxu0 0.0
    %2513 = vmatmul.mubr.f32.gmra.mrb[0].mxu0 %v2278
    %v2514 = vpop.f32.mrb[0].mxu0
    %v2515 = vadd.f32 %v2176, %v2514
    %v2516 = vpop.f32.mrb[0].mxu0
    %v2517 = vadd.f32 %v2176, %v2516
    %2518 = vmatprep.mubr.f32.mxu0 0.0
    %2519 = vmatmul.mubr.f32.gmra.mrb[0].mxu0 %v2281
    %v2520 = vpop.f32.mrb[0].mxu0
    %v2521 = vadd.f32 %v2180, %v2520
    %v2522 = vpop.f32.mrb[0].mxu0
    %v2523 = vadd.f32 %v2180, %v2522
    %2524 = vmatprep.mubr.f32.mxu0 0.0
    %2525 = vmatmul.mubr.f32.gmra.mrb[0].mxu0 %v2284
    %v2526 = vpop.f32.mrb[0].mxu0
    %v2527 = vadd.f32 %v2184, %v2526
    %v2528 = vpop.f32.mrb[0].mxu0
    %v2529 = vadd.f32 %v2184, %v2528
    %2530 = vmatprep.mubr.f32.mxu0 0.0
    %2531 = vmatmul.mubr.f32.gmra.mrb[0].mxu0 %v2287
    %v2532 = vpop.f32.mrb[0].mxu0
    %v2533 = vadd.f32 %v2188, %v2532
    %v2534 = vpop.f32.mrb[0].mxu0
    %v2535 = vadd.f32 %v2188, %v2534
    %2536 = vmatprep.mubr.f32.mxu0 0.0
    %2537 = vmatmul.mubr.f32.gmra.mrb[0].mxu0 %v2290
    %v2538 = vpop.f32.mrb[0].mxu0
    %v2539 = vadd.f32 %v2192, %v2538
    %v2540 = vpop.f32.mrb[0].mxu0
    %v2541 = vadd.f32 %v2192, %v2540
    %2542 = vmatprep.mubr.f32.mxu0 0.0
    %2543 = vmatmul.mubr.f32.gmra.mrb[0].mxu0 %v2293
    %v2544 = vpop.f32.mrb[0].mxu0
    %v2545 = vadd.f32 %v2196, %v2544
    %v2546 = vpop.f32.mrb[0].mxu0
    %v2547 = vadd.f32 %v2196, %v2546
    %2548 = vmatprep.mubr.f32.mxu0 0.0
    %2549 = vmatmul.mubr.f32.gmra.mrb[0].mxu0 %v2296
    %v2550 = vpop.f32.mrb[0].mxu0
    %v2551 = vadd.f32 %v2200, %v2550
    %v2552 = vpop.f32.mrb[0].mxu0
    %v2553 = vadd.f32 %v2200, %v2552
    %2554 = vdwg.mxu0
    %v2555 = vmax.f32 %v2365, 0.0
    %v2556 = vmax.f32 %v2367, 0.0
    %v2557 = vmax.f32 %v2371, 0.0
    %v2558 = vmax.f32 %v2373, 0.0
    %v2559 = vmax.f32 %v2377, 0.0
    %v2560 = vmax.f32 %v2379, 0.0
    %v2561 = vmax.f32 %v2383, 0.0
    %v2562 = vmax.f32 %v2385, 0.0
    %v2563 = vmax.f32 %v2389, 0.0
    %v2564 = vmax.f32 %v2391, 0.0
    %v2565 = vmax.f32 %v2395, 0.0
    %v2566 = vmax.f32 %v2397, 0.0
    %v2567 = vmax.f32 %v2401, 0.0
    %v2568 = vmax.f32 %v2403, 0.0
    %v2569 = vmax.f32 %v2407, 0.0
    %v2570 = vmax.f32 %v2409, 0.0
    %v2571 = vmax.f32 %v2413, 0.0
    %v2572 = vmax.f32 %v2415, 0.0
    %v2573 = vmax.f32 %v2419, 0.0
    %v2574 = vmax.f32 %v2421, 0.0
    %v2575 = vmax.f32 %v2425, 0.0
    %v2576 = vmax.f32 %v2427, 0.0
    %v2577 = vmax.f32 %v2431, 0.0
    %v2578 = vmax.f32 %v2433, 0.0
    %v2579 = vmax.f32 %v2437, 0.0
    %v2580 = vmax.f32 %v2439, 0.0
    %v2581 = vmax.f32 %v2443, 0.0
    %v2582 = vmax.f32 %v2445, 0.0
    %v2583 = vmax.f32 %v2449, 0.0
    %v2584 = vmax.f32 %v2451, 0.0
    %v2585 = vmax.f32 %v2455, 0.0
    %v2586 = vmax.f32 %v2457, 0.0
    %v2587 = vmax.f32 %v2461, 0.0
    %v2588 = vmax.f32 %v2463, 0.0
    %v2589 = vmax.f32 %v2467, 0.0
    %v2590 = vmax.f32 %v2469, 0.0
    %v2591 = vmax.f32 %v2473, 0.0
    %v2592 = vmax.f32 %v2475, 0.0
    %v2593 = vmax.f32 %v2479, 0.0
    %v2594 = vmax.f32 %v2481, 0.0
    %v2595 = vmax.f32 %v2485, 0.0
    %v2596 = vmax.f32 %v2487, 0.0
    %v2597 = vmax.f32 %v2491, 0.0
    %v2598 = vmax.f32 %v2493, 0.0
    %v2599 = vmax.f32 %v2497, 0.0
    %v2600 = vmax.f32 %v2499, 0.0
    %v2601 = vmax.f32 %v2503, 0.0
    %v2602 = vmax.f32 %v2505, 0.0
    %v2603 = vmax.f32 %v2509, 0.0
    %v2604 = vmax.f32 %v2511, 0.0
    %v2605 = vmax.f32 %v2515, 0.0
    %v2606 = vmax.f32 %v2517, 0.0
    %v2607 = vmax.f32 %v2521, 0.0
    %v2608 = vmax.f32 %v2523, 0.0
    %v2609 = vmax.f32 %v2527, 0.0
    %v2610 = vmax.f32 %v2529, 0.0
    %v2611 = vmax.f32 %v2533, 0.0
    %v2612 = vmax.f32 %v2535, 0.0
    %v2613 = vmax.f32 %v2539, 0.0
    %v2614 = vmax.f32 %v2541, 0.0
    %v2615 = vmax.f32 %v2545, 0.0
    %v2616 = vmax.f32 %v2547, 0.0
    %v2617 = vmax.f32 %v2551, 0.0
    %v2618 = vmax.f32 %v2553, 0.0
    %s2619 = scalar_lea.vmem %s4, 128
    %v2620 = vld [vmem:[%s2619] sm:$0xff]
    %v2621 = vld [vmem:[%s2619 + $0x8] sm:$0xff]
    %v2622 = vld [vmem:[%s2619 + $0x10] sm:$0xff]
    %v2623 = vld [vmem:[%s2619 + $0x18] sm:$0xff]
    %v2624 = vld [vmem:[%s2619 + $0x20] sm:$0xff]
    %v2625 = vld [vmem:[%s2619 + $0x28] sm:$0xff]
    %v2626 = vld [vmem:[%s2619 + $0x30] sm:$0xff]
    %v2627 = vld [vmem:[%s2619 + $0x38] sm:$0xff]
    %v2628 = vld [vmem:[%s2619 + $0x40] sm:$0xff]
    %v2629 = vld [vmem:[%s2619 + $0x48] sm:$0xff]
    %v2630 = vld [vmem:[%s2619 + $0x50] sm:$0xff]
    %v2631 = vld [vmem:[%s2619 + $0x58] sm:$0xff]
    %v2632 = vld [vmem:[%s2619 + $0x60] sm:$0xff]
    %v2633 = vld [vmem:[%s2619 + $0x68] sm:$0xff]
    %v2634 = vld [vmem:[%s2619 + $0x70] sm:$0xff]
    %v2635 = vld [vmem:[%s2619 + $0x78] sm:$0xff]
    %2636 = vset.pattern.permute.xlu0 12
    %2637 = vperm.xlu0 %2636, %v36
    %v2638 = vpop.permute.xlu0 %2637
    %2640 = vset.pattern.permute.xlu0 12
    %2641 = vperm.xlu0 %2640, %v37
    %v2642 = vpop.permute.xlu0 %2641
    %2644 = vset.pattern.permute.xlu0 12
    %2645 = vperm.xlu0 %2644, %v38
    %v2646 = vpop.permute.xlu0 %2645
    %2648 = vset.pattern.permute.xlu0 12
    %2649 = vperm.xlu0 %2648, %v39
    %v2650 = vpop.permute.xlu0 %2649
    %2652 = vset.pattern.permute.xlu0 12
    %2653 = vperm.xlu0 %2652, %v40
    %v2654 = vpop.permute.xlu0 %2653
    %2656 = vset.pattern.permute.xlu0 12
    %2657 = vperm.xlu0 %2656, %v41
    %v2658 = vpop.permute.xlu0 %2657
    %2660 = vset.pattern.permute.xlu0 12
    %2661 = vperm.xlu0 %2660, %v42
    %v2662 = vpop.permute.xlu0 %2661
    %2664 = vset.pattern.permute.xlu0 12
    %2665 = vperm.xlu0 %2664, %v43
    %v2666 = vpop.permute.xlu0 %2665
    %2668 = vmatprep.subr.mxu0 %v2556
    %2669 = vmatpush1.msra.mxu0 %v2555
    %2670 = vmatprep.subr.mxu0 %v2558
    %2671 = vmatpush1.msra.mxu0 %v2557
    %2672 = vmatprep.subr.mxu0 %v2560
    %2673 = vmatpush1.msra.mxu0 %v2559
    %2674 = vmatprep.subr.mxu0 %v2562
    %2675 = vmatpush1.msra.mxu0 %v2561
    %2676 = vmatprep.subr.mxu0 %v2564
    %2677 = vmatpush1.msra.mxu0 %v2563
    %2678 = vmatprep.subr.mxu0 %v2566
    %2679 = vmatpush1.msra.mxu0 %v2565
    %2680 = vmatprep.subr.mxu0 %v2568
    %2681 = vmatpush1.msra.mxu0 %v2567
    %2682 = vmatprep.subr.mxu0 %v2570
    %2683 = vmatpush1.msra.mxu0 %v2569
    %2684 = vmatprep.subr.mxu0 %v2572
    %2685 = vmatpush1.msra.mxu0 %v2571
    %2686 = vmatprep.subr.mxu0 %v2574
    %2687 = vmatpush1.msra.mxu0 %v2573
    %2688 = vmatprep.subr.mxu0 %v2576
    %2689 = vmatpush1.msra.mxu0 %v2575
    %2690 = vmatprep.subr.mxu0 %v2578
    %2691 = vmatpush1.msra.mxu0 %v2577
    %2692 = vmatprep.subr.mxu0 %v2580
    %2693 = vmatpush1.msra.mxu0 %v2579
    %2694 = vmatprep.subr.mxu0 %v2582
    %2695 = vmatpush1.msra.mxu0 %v2581
    %2696 = vmatprep.subr.mxu0 %v2584
    %2697 = vmatpush1.msra.mxu0 %v2583
    %2698 = vmatprep.subr.mxu0 %v2586
    %2699 = vmatpush1.msra.mxu0 %v2585
    %2700 = vmatprep.subr.mxu0 %v2588
    %2701 = vmatpush1.msra.mxu0 %v2587
    %2702 = vmatprep.subr.mxu0 %v2590
    %2703 = vmatpush1.msra.mxu0 %v2589
    %2704 = vmatprep.subr.mxu0 %v2592
    %2705 = vmatpush1.msra.mxu0 %v2591
    %2706 = vmatprep.subr.mxu0 %v2594
    %2707 = vmatpush1.msra.mxu0 %v2593
    %2708 = vmatprep.subr.mxu0 %v2596
    %2709 = vmatpush1.msra.mxu0 %v2595
    %2710 = vmatprep.subr.mxu0 %v2598
    %2711 = vmatpush1.msra.mxu0 %v2597
    %2712 = vmatprep.subr.mxu0 %v2600
    %2713 = vmatpush1.msra.mxu0 %v2599
    %2714 = vmatprep.subr.mxu0 %v2602
    %2715 = vmatpush1.msra.mxu0 %v2601
    %2716 = vmatprep.subr.mxu0 %v2604
    %2717 = vmatpush1.msra.mxu0 %v2603
    %2718 = vmatprep.subr.mxu0 %v2606
    %2719 = vmatpush1.msra.mxu0 %v2605
    %2720 = vmatprep.subr.mxu0 %v2608
    %2721 = vmatpush1.msra.mxu0 %v2607
    %2722 = vmatprep.subr.mxu0 %v2610
    %2723 = vmatpush1.msra.mxu0 %v2609
    %2724 = vmatprep.subr.mxu0 %v2612
    %2725 = vmatpush1.msra.mxu0 %v2611
    %2726 = vmatprep.subr.mxu0 %v2614
    %2727 = vmatpush1.msra.mxu0 %v2613
    %2728 = vmatprep.subr.mxu0 %v2616
    %2729 = vmatpush1.msra.mxu0 %v2615
    %2730 = vmatprep.subr.mxu0 %v2618
    %2731 = vmatpush1.msra.mxu0 %v2617
    %2732 = vmatprep.mubr.f32.mxu0 %v2621
    %2733 = vmatmul.mubr.f32.gmra.mrb[0].mxu0 %v2620
    %v2734 = vpop.f32.mrb[0].mxu0
    %v2735 = vadd.f32 %v2638, %v2734
    %v2736 = vpop.f32.mrb[0].mxu0
    %v2737 = vadd.f32 %v2638, %v2736
    %2738 = vmatprep.mubr.f32.mxu0 %v2623
    %2739 = vmatmul.mubr.f32.gmra.mrb[0].mxu0 %v2622
    %v2740 = vpop.f32.mrb[0].mxu0
    %v2741 = vadd.f32 %v2642, %v2740
    %v2742 = vpop.f32.mrb[0].mxu0
    %v2743 = vadd.f32 %v2642, %v2742
    %2744 = vmatprep.mubr.f32.mxu0 %v2625
    %2745 = vmatmul.mubr.f32.gmra.mrb[0].mxu0 %v2624
    %v2746 = vpop.f32.mrb[0].mxu0
    %v2747 = vadd.f32 %v2646, %v2746
    %v2748 = vpop.f32.mrb[0].mxu0
    %v2749 = vadd.f32 %v2646, %v2748
    %2750 = vmatprep.mubr.f32.mxu0 %v2627
    %2751 = vmatmul.mubr.f32.gmra.mrb[0].mxu0 %v2626
    %v2752 = vpop.f32.mrb[0].mxu0
    %v2753 = vadd.f32 %v2650, %v2752
    %v2754 = vpop.f32.mrb[0].mxu0
    %v2755 = vadd.f32 %v2650, %v2754
    %2756 = vmatprep.mubr.f32.mxu0 %v2629
    %2757 = vmatmul.mubr.f32.gmra.mrb[0].mxu0 %v2628
    %v2758 = vpop.f32.mrb[0].mxu0
    %v2759 = vadd.f32 %v2654, %v2758
    %v2760 = vpop.f32.mrb[0].mxu0
    %v2761 = vadd.f32 %v2654, %v2760
    %2762 = vmatprep.mubr.f32.mxu0 %v2631
    %2763 = vmatmul.mubr.f32.gmra.mrb[0].mxu0 %v2630
    %v2764 = vpop.f32.mrb[0].mxu0
    %v2765 = vadd.f32 %v2658, %v2764
    %v2766 = vpop.f32.mrb[0].mxu0
    %v2767 = vadd.f32 %v2658, %v2766
    %2768 = vmatprep.mubr.f32.mxu0 %v2633
    %2769 = vmatmul.mubr.f32.gmra.mrb[0].mxu0 %v2632
    %v2770 = vpop.f32.mrb[0].mxu0
    %v2771 = vadd.f32 %v2662, %v2770
    %v2772 = vpop.f32.mrb[0].mxu0
    %v2773 = vadd.f32 %v2662, %v2772
    %2774 = vmatprep.mubr.f32.mxu0 %v2635
    %2775 = vmatmul.mubr.f32.gmra.mrb[0].mxu0 %v2634
    %v2776 = vpop.f32.mrb[0].mxu0
    %v2777 = vadd.f32 %v2666, %v2776
    %v2778 = vpop.f32.mrb[0].mxu0
    %v2779 = vadd.f32 %v2666, %v2778
    %2780 = vdwg.mxu0
    %v2781 = vadd.f32 %v2025, %v2735
    %v2782 = vadd.f32 %v2026, %v2737
    %v2783 = vadd.f32 %v2027, %v2741
    %v2784 = vadd.f32 %v2028, %v2743
    %v2785 = vadd.f32 %v2029, %v2747
    %v2786 = vadd.f32 %v2030, %v2749
    %v2787 = vadd.f32 %v2031, %v2753
    %v2788 = vadd.f32 %v2032, %v2755
    %v2789 = vadd.f32 %v2033, %v2759
    %v2790 = vadd.f32 %v2034, %v2761
    %v2791 = vadd.f32 %v2035, %v2765
    %v2792 = vadd.f32 %v2036, %v2767
    %v2793 = vadd.f32 %v2037, %v2771
    %v2794 = vadd.f32 %v2038, %v2773
    %v2795 = vadd.f32 %v2039, %v2777
    %v2796 = vadd.f32 %v2040, %v2779
    %v2797 = vadd.f32 %v2781, %v2783
    %v2798 = vadd.f32 %v2797, %v2785
    %v2799 = vadd.f32 %v2798, %v2787
    %v2800 = vadd.f32 %v2799, %v2789
    %v2801 = vadd.f32 %v2800, %v2791
    %v2802 = vadd.f32 %v2801, %v2793
    %v2803 = vadd.f32 %v2802, %v2795
    %v2804 = vrot.slane %v2803, 4
    %v2805 = vadd.f32 %v2803, %v2804
    %v2806 = vrot.slane %v2805, 2
    %v2807 = vadd.f32 %v2805, %v2806
    %v2808 = vrot.slane %v2807, 1
    %v2809 = vadd.f32 %v2807, %v2808
    %v2810 = vadd.f32 %v2782, %v2784
    %v2811 = vadd.f32 %v2810, %v2786
    %v2812 = vadd.f32 %v2811, %v2788
    %v2813 = vadd.f32 %v2812, %v2790
    %v2814 = vadd.f32 %v2813, %v2792
    %v2815 = vadd.f32 %v2814, %v2794
    %v2816 = vadd.f32 %v2815, %v2796
    %v2817 = vrot.slane %v2816, 4
    %v2818 = vadd.f32 %v2816, %v2817
    %v2819 = vrot.slane %v2818, 2
    %v2820 = vadd.f32 %v2818, %v2819
    %v2821 = vrot.slane %v2820, 1
    %v2822 = vadd.f32 %v2820, %v2821
    %v2823 = vmul.f32 %v2809, %v442
    %v2824 = vmul.f32 %v2822, %v442
    %v2825 = vsub.f32 %v2781, %v2823
    %v2826 = vsub.f32 %v2782, %v2824
    %v2827 = vsub.f32 %v2783, %v2823
    %v2828 = vsub.f32 %v2784, %v2824
    %v2829 = vsub.f32 %v2785, %v2823
    %v2830 = vsub.f32 %v2786, %v2824
    %v2831 = vsub.f32 %v2787, %v2823
    %v2832 = vsub.f32 %v2788, %v2824
    %v2833 = vsub.f32 %v2789, %v2823
    %v2834 = vsub.f32 %v2790, %v2824
    %v2835 = vsub.f32 %v2791, %v2823
    %v2836 = vsub.f32 %v2792, %v2824
    %v2837 = vsub.f32 %v2793, %v2823
    %v2838 = vsub.f32 %v2794, %v2824
    %v2839 = vsub.f32 %v2795, %v2823
    %v2840 = vsub.f32 %v2796, %v2824
    %v2841 = vmul.f32 %v2825, %v2825
    %v2842 = vmul.f32 %v2826, %v2826
    %v2843 = vmul.f32 %v2827, %v2827
    %v2844 = vmul.f32 %v2828, %v2828
    %v2845 = vmul.f32 %v2829, %v2829
    %v2846 = vmul.f32 %v2830, %v2830
    %v2847 = vmul.f32 %v2831, %v2831
    %v2848 = vmul.f32 %v2832, %v2832
    %v2849 = vmul.f32 %v2833, %v2833
    %v2850 = vmul.f32 %v2834, %v2834
    %v2851 = vmul.f32 %v2835, %v2835
    %v2852 = vmul.f32 %v2836, %v2836
    %v2853 = vmul.f32 %v2837, %v2837
    %v2854 = vmul.f32 %v2838, %v2838
    %v2855 = vmul.f32 %v2839, %v2839
    %v2856 = vmul.f32 %v2840, %v2840
    %v2857 = vadd.f32 %v2841, %v2843
    %v2858 = vadd.f32 %v2857, %v2845
    %v2859 = vadd.f32 %v2858, %v2847
    %v2860 = vadd.f32 %v2859, %v2849
    %v2861 = vadd.f32 %v2860, %v2851
    %v2862 = vadd.f32 %v2861, %v2853
    %v2863 = vadd.f32 %v2862, %v2855
    %v2864 = vrot.slane %v2863, 4
    %v2865 = vadd.f32 %v2863, %v2864
    %v2866 = vrot.slane %v2865, 2
    %v2867 = vadd.f32 %v2865, %v2866
    %v2868 = vrot.slane %v2867, 1
    %v2869 = vadd.f32 %v2867, %v2868
    %v2870 = vadd.f32 %v2842, %v2844
    %v2871 = vadd.f32 %v2870, %v2846
    %v2872 = vadd.f32 %v2871, %v2848
    %v2873 = vadd.f32 %v2872, %v2850
    %v2874 = vadd.f32 %v2873, %v2852
    %v2875 = vadd.f32 %v2874, %v2854
    %v2876 = vadd.f32 %v2875, %v2856
    %v2877 = vrot.slane %v2876, 4
    %v2878 = vadd.f32 %v2876, %v2877
    %v2879 = vrot.slane %v2878, 2
    %v2880 = vadd.f32 %v2878, %v2879
    %v2881 = vrot.slane %v2880, 1
    %v2882 = vadd.f32 %v2880, %v2881
    %v2883 = vmul.f32 %v2869, %v442
    %v2884 = vmul.f32 %v2882, %v442
    %v2885 = vadd.f32 %v2883, 1e-05
    %v2886 = vadd.f32 %v2884, 1e-05
    %v2887 = vrsqrt.pop %v2885
    %v2888 = vrsqrt.pop %v2886
    %v2889 = vmul.f32 %v2825, %v2887
    %v2890 = vmul.f32 %v2826, %v2888
    %v2891 = vmul.f32 %v2827, %v2887
    %v2892 = vmul.f32 %v2828, %v2888
    %v2893 = vmul.f32 %v2829, %v2887
    %v2894 = vmul.f32 %v2830, %v2888
    %v2895 = vmul.f32 %v2831, %v2887
    %v2896 = vmul.f32 %v2832, %v2888
    %v2897 = vmul.f32 %v2833, %v2887
    %v2898 = vmul.f32 %v2834, %v2888
    %v2899 = vmul.f32 %v2835, %v2887
    %v2900 = vmul.f32 %v2836, %v2888
    %v2901 = vmul.f32 %v2837, %v2887
    %v2902 = vmul.f32 %v2838, %v2888
    %v2903 = vmul.f32 %v2839, %v2887
    %v2904 = vmul.f32 %v2840, %v2888
    %2905 = vset.pattern.permute.xlu0 15
    %2906 = vperm.xlu0 %2905, %v36
    %v2907 = vpop.permute.xlu0 %2906
    %2909 = vset.pattern.permute.xlu0 15
    %2910 = vperm.xlu0 %2909, %v37
    %v2911 = vpop.permute.xlu0 %2910
    %2913 = vset.pattern.permute.xlu0 15
    %2914 = vperm.xlu0 %2913, %v38
    %v2915 = vpop.permute.xlu0 %2914
    %2917 = vset.pattern.permute.xlu0 15
    %2918 = vperm.xlu0 %2917, %v39
    %v2919 = vpop.permute.xlu0 %2918
    %2921 = vset.pattern.permute.xlu0 15
    %2922 = vperm.xlu0 %2921, %v40
    %v2923 = vpop.permute.xlu0 %2922
    %2925 = vset.pattern.permute.xlu0 15
    %2926 = vperm.xlu0 %2925, %v41
    %v2927 = vpop.permute.xlu0 %2926
    %2929 = vset.pattern.permute.xlu0 15
    %2930 = vperm.xlu0 %2929, %v42
    %v2931 = vpop.permute.xlu0 %2930
    %2933 = vset.pattern.permute.xlu0 15
    %2934 = vperm.xlu0 %2933, %v43
    %v2935 = vpop.permute.xlu0 %2934
    %v2937 = vmul.f32 %v2889, %v2907
    %v2938 = vmul.f32 %v2890, %v2907
    %v2939 = vmul.f32 %v2891, %v2911
    %v2940 = vmul.f32 %v2892, %v2911
    %v2941 = vmul.f32 %v2893, %v2915
    %v2942 = vmul.f32 %v2894, %v2915
    %v2943 = vmul.f32 %v2895, %v2919
    %v2944 = vmul.f32 %v2896, %v2919
    %v2945 = vmul.f32 %v2897, %v2923
    %v2946 = vmul.f32 %v2898, %v2923
    %v2947 = vmul.f32 %v2899, %v2927
    %v2948 = vmul.f32 %v2900, %v2927
    %v2949 = vmul.f32 %v2901, %v2931
    %v2950 = vmul.f32 %v2902, %v2931
    %v2951 = vmul.f32 %v2903, %v2935
    %v2952 = vmul.f32 %v2904, %v2935
    %v2953 = vadd.f32 %v2937, %v2939
    %v2954 = vadd.f32 %v2953, %v2941
    %v2955 = vadd.f32 %v2954, %v2943
    %v2956 = vadd.f32 %v2955, %v2945
    %v2957 = vadd.f32 %v2956, %v2947
    %v2958 = vadd.f32 %v2957, %v2949
    %v2959 = vadd.f32 %v2958, %v2951
    %v2960 = vrot.slane %v2959, 4
    %v2961 = vadd.f32 %v2959, %v2960
    %v2962 = vrot.slane %v2961, 2
    %v2963 = vadd.f32 %v2961, %v2962
    %v2964 = vrot.slane %v2963, 1
    %v2965 = vadd.f32 %v2963, %v2964
    %v2966 = vadd.f32 %v2938, %v2940
    %v2967 = vadd.f32 %v2966, %v2942
    %v2968 = vadd.f32 %v2967, %v2944
    %v2969 = vadd.f32 %v2968, %v2946
    %v2970 = vadd.f32 %v2969, %v2948
    %v2971 = vadd.f32 %v2970, %v2950
    %v2972 = vadd.f32 %v2971, %v2952
    %v2973 = vrot.slane %v2972, 4
    %v2974 = vadd.f32 %v2972, %v2973
    %v2975 = vrot.slane %v2974, 2
    %v2976 = vadd.f32 %v2974, %v2975
    %v2977 = vrot.slane %v2976, 1
    %v2978 = vadd.f32 %v2976, %v2977
    %v2979 = vld [vmem:[%s5] sm:$0x1]
    %2981 = vset.pattern.permute.xlu0 16
    %2982 = vperm.xlu0 %2981, %v2979
    %v2983 = vpop.permute.xlu0 %2982
    %v2985 = vadd.f32 %v2965, %v2983
    %v2986 = vadd.f32 %v2978, %v2983
    %v2987 = vxor.u32 %v2985, 2147483648
    %v2988 = vxor.u32 %v2986, 2147483648
    %v2989 = vmul.f32 %v2987, 1.442695
    %v2990 = vpow.pop %v2989
    %v2991 = vmul.f32 %v2988, 1.442695
    %v2992 = vpow.pop %v2991
    %v2993 = vadd.f32 %v2990, 1.0
    %v2994 = vadd.f32 %v2992, 1.0
    %v2995 = vrcp.pop %v2993
    %v2996 = vmul.f32 1.0, %v2995
    %v2997 = vrcp.pop %v2994
    %v2998 = vmul.f32 1.0, %v2997
    %v3001 = vcombine.low %v2996, %v2998
    %v3003 = vunpack.c.l.s4 1966171168
    %v3004 = vunpack.c.0.s8 %v3003
    %v3005 = vlaneseq
    %v3006 = vshrl.u32 %v3005, 7
    %v3007 = vsub.s32 %v3004, %v3006
    %v3008 = vrot.slane %v3001, %v3007
    %v3010 = vunpack.c.l.s4 1966171168
    %v3011 = vunpack.c.0.s8 %v3010
    %v3012 = vlaneseq
    %v3013 = vshrl.u32 %v3012, 7
    %v3014 = vsub.s32 %v3011, %v3013
    %v3015 = vrot.slane %v3008, %v3014
    %v3017 = vlaneseq
    %vm3018 = vcmp.ge.s32.totalorder %v3017, 0
    %vm3019 = vcmp.lt.s32.totalorder %v3017, 256
    %vm3020 = vmand %vm3018, %vm3019
    %3021 = vst.msk [vmem:[#allocation2] sm:$0x3] %vm3020, %v3015
    // Predicated region
    $region26: #{tpu_custom_call.1} parent=1 // pred_check
      _
    $region27: #{tpu_custom_call.1} parent=1 // pred_check_branch
      %3023 = sbr.rel (0) target = $region29
    $region28: #{tpu_custom_call.1} parent=1 // pred_region
      %s3025 = ssub.s32 32, 32
      %3026 = vsyncadd [#allocation3], %s3025
      %s3028 = sshll.u32 [#allocation2], 4
      %s3029 = int_to_ptr.vmem [resolvable:$true] %s3028
      %3031 = dma.vmem_to_hbm [thread:$0]  %s3029, 32, %s6, [#allocation3]
    $region29: #{tpu_custom_call.1} parent=1 // pred_fallthru
      _
    // Predicated region
    $region30: #{tpu_custom_call.1} parent=1 // pred_check
      _
    $region31: #{tpu_custom_call.1} parent=1 // pred_check_branch
      %3033 = sbr.rel (0) target = $region33
    $region32: #{tpu_custom_call.1} parent=1 // pred_region
      %3034 = dma.done [#allocation3], 32
    $region33: #{tpu_custom_call.1} parent=1 // pred_fallthru
      _
    %3035 = vsyncpa [#allocation3], 1

</llo_original>
